<compile_context>
chip_gen: v5e
topology: v5e:2x2
jax: 0.10.0
libtpu: 0.0.40
codegen_flags: <defaults>
</compile_context>

<pallas_src>
from functools import partial

import numpy as np
import jax
import jax.numpy as jnp
from jax.experimental import pallas as pl
from jax.experimental.pallas import tpu as pltpu

C_SLAB = 128          # lane-padded width of the GCN skip-concat slab
OC_PAD = 128          # lane-padded width of the logits slab


# ------------------------- Pallas kernel #1: GCN stack ----------------------
def gcn_stack_kernel(a_ref, x_ref,
                     w1_ref, b1_ref, w2_ref, b2_ref,
                     w3_ref, b3_ref, w4_ref, b4_ref, z_ref):
    """One padded graph per grid step.

    h_{i+1} = act( A_norm @ (h_i @ W_i) + b_i ), tanh for all but the last layer
    (matches torch GCNConv's x@W-then-aggregate order).  Weights are lane-placed
    [128, 128] blocks, so each h_i is a [M, 128] slab non-zero only on its own lane
    range; the fused skip-concat [x | h1 | h2 | h3 | h4 | 0-pad] is the sum of the
    five pieces and a single lane-dense store.
    """
    bf16, f32 = jnp.bfloat16, jnp.float32
    a = a_ref[...]                                   # [M, M]   bf16 (cast in glue)
    x = x_ref[...]                                   # [M, 128] f32, lanes [0, in_ch)

    def layer(h, w_ref, b_ref, act):
        hw = jnp.dot(h.astype(bf16), w_ref[...], preferred_element_type=f32)
        out = jnp.dot(a, hw.astype(bf16), preferred_element_type=f32) + b_ref[...]
        # Activation kept in f32 (v5e has no bf16 VPU/EUP path).
        # TODO(synk): on v6e/v7x (bf16 VPU/EUP) the bias-add + tanh could run in bf16.
        return jnp.tanh(out) if act else out

    h1 = layer(x,  w1_ref, b1_ref, True)
    h2 = layer(h1, w2_ref, b2_ref, True)
    h3 = layer(h2, w3_ref, b3_ref, True)
    h4 = layer(h3, w4_ref, b4_ref, False)            # sort channel: no tanh

    # Lane-disjoint placements -> the add IS the skip-concat; one unmasked store.
    z_ref[...] = x + h1 + h2 + h3 + h4


def run_gcn_stack(a_pad, x_pad, params):
    B, M, _ = a_pad.shape
    wspec = pl.BlockSpec((C_SLAB, C_SLAB), lambda g: (0, 0))
    bspec = pl.BlockSpec((1, C_SLAB), lambda g: (0, 0))
    # TODO(synk): for very large per-graph M, additionally row-tile A with a
    # reduction-last grid + accumulator scratch (budget against v7x's 64 MiB VMEM).
    return pl.pallas_call(
        gcn_stack_kernel,
        grid=(B,),
        in_specs=[
            pl.BlockSpec((None, M, M), lambda g: (g, 0, 0)),
            pl.BlockSpec((None, M, C_SLAB), lambda g: (g, 0, 0)),
            wspec, bspec, wspec, bspec, wspec, bspec, wspec, bspec,
        ],
        out_specs=pl.BlockSpec((None, M, C_SLAB), lambda g: (g, 0, 0)),
        out_shape=jax.ShapeDtypeStruct((B, M, C_SLAB), jnp.float32),
        compiler_params=pltpu.CompilerParams(
            dimension_semantics=("parallel",),       # per-graph axis -> v7x dual TC
            vmem_limit_bytes=32 << 20),
    )(a_pad, x_pad,
      params["Wg1f"], params["bg1p"], params["Wg2f"], params["bg2p"],
      params["Wg3f"], params["bg3p"], params["Wg4f"], params["bg4p"])


# --------------------- Pallas kernel #2: CNN + dense head -------------------
def cnn_head_kernel(x_ref, wc1_ref, bc1_ref, s2_ref, wc2_ref, bc2_ref,
                    sf_ref, wd1_ref, bd1_ref, wd2_ref, bd2_ref, o_ref):
    bf16, f32 = jnp.bfloat16, jnp.float32
    G = o_ref.shape[0]
    GK = x_ref.shape[0]
    k = GK // G
    K = wc1_ref.shape[0]
    C1 = wc1_ref.shape[2]
    C2 = wc2_ref.shape[2]
    L1 = k - K + 1                 # conv1 output length per graph
    Lp = L1 // 2                   # MaxPool1d(kernel=2, stride=2)
    L2 = Lp - K + 1                # conv2 output length per graph
    R1 = GK - K + 1                # conv1 rows over the folded slab
    R2 = G * Lp - K + 1            # conv2 rows over the folded pooled slab

    x = x_ref[...]                                              # [G*k, 128] bf16

    # conv1d_1 + ReLU for all graphs at once: K shifted matmuls over the folded slab
    # (cross-graph rows are discarded by the pooling selection matmul below).
    acc1 = jnp.zeros((R1, C1), f32)
    for t in range(K):                                          # static unroll
        acc1 = acc1 + jnp.dot(x[t:t + R1, :], wc1_ref[t],
                              preferred_element_type=f32)
    h1 = jnp.maximum(acc1 + bc1_ref[...], 0.0)                  # [R1, C1] f32

    # MaxPool1d(2,2): neighbour-max + one host-precomputed block-structured even-row
    # selection matmul (also drops the cross-graph conv1 rows).
    m = jnp.maximum(h1[:R1 - 1, :], h1[1:, :])                  # [R1-1, C1]
    pooled = jnp.dot(s2_ref[...], m.astype(bf16),
                     preferred_element_type=f32).astype(bf16)   # [G*Lp, C1]

    # conv1d_2 + ReLU: K shifted matmuls on the folded pooled slab.
    acc2 = jnp.zeros((R2, C2), f32)
    for t in range(K):
        acc2 = acc2 + jnp.dot(pooled[t:t + R2, :], wc2_ref[t],
                              preferred_element_type=f32)
    h2 = jnp.maximum(acc2 + bc2_ref[...], 0.0).astype(bf16)     # [R2, C2]

    # conv2 valid-row selection + channel-major flatten (torch .view) + dense1,
    # fused: for every in-graph position l, select that row of all G graphs and
    # multiply by the matching C2-row block of the (pre-permuted) dense1 weight.
    # Built fully in registers -- no scratch round-trip, no masked stores.
    dh = wd1_ref.shape[1]
    d1acc = jnp.zeros((G, dh), f32)
    for l in range(L2):                                         # static unroll
        part = jnp.dot(sf_ref[l * G:(l + 1) * G, :], h2,
                       preferred_element_type=f32)              # [G, C2]
        d1acc = d1acc + jnp.dot(part.astype(bf16),
                                wd1_ref[l * C2:(l + 1) * C2, :],
                                preferred_element_type=f32)
    d1 = jnp.maximum(d1acc + bd1_ref[...], 0.0)                 # [G, DH]

    # dropout: inference mode (training=False) -> identity
    logits = jnp.dot(d1.astype(bf16), wd2_ref[...],
                     preferred_element_type=f32) + bd2_ref[...]
    o_ref[...] = logits                                         # [G, 128] unmasked vst


def run_cnn_head(slab, params, *, G, k):
    GK = G * k
    rows = slab.shape[0]
    assert rows % GK == 0 and GK % 8 == 0, "G*k must be 8-aligned and divide the slab"
    n_blocks = rows // GK

    def full(arr):
        nd = arr.ndim
        return pl.BlockSpec(arr.shape, lambda b, _nd=nd: (0,) * _nd)

    return pl.pallas_call(
        cnn_head_kernel,
        grid=(n_blocks,),
        in_specs=[pl.BlockSpec((GK, C_SLAB), lambda b: (b, 0)),
                  full(params["Wc1t"]), full(params["bc1"]),
                  full(params["S2"]),
                  full(params["Wc2t"]), full(params["bc2"]),
                  full(params["SelF"]),
                  full(params["Wd1f"]), full(params["bd1"]),
                  full(params["Wd2p"]), full(params["bd2p"])],
        out_specs=pl.BlockSpec((G, OC_PAD), lambda b: (b, 0)),
        out_shape=jax.ShapeDtypeStruct((n_blocks * G, OC_PAD), jnp.float32),
        compiler_params=pltpu.CompilerParams(
            # TODO(synk): for large batches on v7x pick `group` so n_blocks >= 2,
            # otherwise the second TensorCore idles on this parallel axis.
            dimension_semantics=("parallel",),
            vmem_limit_bytes=32 << 20),
    )(slab, params["Wc1t"], params["bc1"], params["S2"], params["Wc2t"],
      params["bc2"], params["SelF"], params["Wd1f"], params["bd1"],
      params["Wd2p"], params["bd2p"])


# ------------------------- On-device SortPooling (JAX) ----------------------
def sort_pool_device(z_pad, counts, *, k, key_col):
    """SortPooling on device: mask padded rows, stable descending sort on the last
    GCN channel, gather, keep/pad to k rows.  (jnp.argsort is stable; torch.sort
    gives no stability guarantee, so tied keys may order differently.)"""
    B, M, C = z_pad.shape
    valid = jnp.arange(M, dtype=jnp.int32)[None, :] < counts[:, None]     # [B, M]
    key = jnp.where(valid, z_pad[:, :, key_col], jnp.float32(-1e10))
    feats = jnp.where(valid[:, :, None], z_pad, 0.0)
    perm = jnp.argsort(-key, axis=-1)                                     # stable
    idx = jnp.broadcast_to(perm[:, :, None], (B, M, C))
    sorted_x = jnp.take_along_axis(feats, idx, axis=1)
    if M >= k:
        return sorted_x[:, :k]
    return jnp.concatenate(
        [sorted_x, jnp.zeros((B, k - M, C), sorted_x.dtype)], axis=1)


# --------------------------- Fused jitted forward ---------------------------
@partial(jax.jit, static_argnames=("k", "group", "out_channels", "key_col"))
def dgcnn_forward(params, a_pad, x_pad, counts, *, k, group, out_channels, key_col):
    z_pad = run_gcn_stack(a_pad, x_pad, params)                  # [B, M, 128]
    pooled = sort_pool_device(z_pad, counts, k=k, key_col=key_col)   # [B, k, 128]
    B = pooled.shape[0]
    G = group
    B_pad = -(-B // G) * G
    if B_pad != B:
        pooled = jnp.concatenate(
            [pooled, jnp.zeros((B_pad - B, k, C_SLAB), pooled.dtype)], axis=0)
    slab = pooled.reshape(B_pad * k, C_SLAB).astype(jnp.bfloat16)
    logits_pad = run_cnn_head(slab, params, G=G, k=k)            # [B_pad, 128]
    return logits_pad[:B, :out_channels]


# ------------------------------- Glue (host setup) --------------------------
def build_norm_adj_local(src, dst, w, n):
    """GCN symmetric normalization D^{-1/2} (A + I) D^{-1/2} for one graph."""
    A = np.zeros((n, n), np.float32)
    np.add.at(A, (dst, src), w)                  # message src -> dst
    A = A + np.eye(n, dtype=np.float32)          # self loops
    deg = A.sum(axis=1)
    dinv = 1.0 / np.sqrt(np.maximum(deg, 1e-12))
    return dinv[:, None] * A * dinv[None, :]


def build_batched_inputs(x_np, edge_index, sizes, edge_weight=None):
    """Per-graph padded (block-diagonal) adjacency + lane-placed node features."""
    src, dst = np.asarray(edge_index[0]), np.asarray(edge_index[1])
    w = (np.ones(src.shape[0], np.float32) if edge_weight is None
         else np.asarray(edge_weight, np.float32))
    B = len(sizes)
    M = max(8, -(-max(sizes) // 8) * 8)          # sublane-aligned per-graph padding
    in_ch = x_np.shape[1]
    a_pad = np.zeros((B, M, M), np.float32)
    x_pad = np.zeros((B, M, C_SLAB), np.float32)
    off = 0
    for g, n in enumerate(sizes):
        sel = (src >= off) & (src < off + n)
        a_pad[g, :n, :n] = build_norm_adj_local(src[sel] - off, dst[sel] - off,
                                                w[sel], n)
        x_pad[g, :n, :in_ch] = x_np[off:off + n]
        off += n
    return (jnp.asarray(a_pad, jnp.bfloat16), jnp.asarray(x_pad, jnp.float32),
            jnp.asarray(np.asarray(sizes, np.int32)))


def init_params(key, in_ch, hid, out_ch, num_gcn, k, c1, K, dh, group):
    """Deterministic synthetic parameters (shapes follow the PyTorch module),
    pre-arranged into the kernels' lane-placed / per-tap matmul layouts."""
    assert num_gcn == 4, "kernel is specialised to 4 GCN layers"
    keys = jax.random.split(key, 16)
    ki = 0
    params = {}

    # ---- GCN layers: lane-placed [128, 128] weights / [1, 128] biases -------
    widths = [in_ch, hid, hid, hid, 1]                  # x, h1, h2, h3, h4
    offs = np.cumsum([0] + widths[:-1]).tolist()        # lane offset of each piece
    C_total = sum(widths)
    for i in range(4):
        w = 0.3 * jax.random.normal(keys[ki], (widths[i], widths[i + 1]), jnp.float32); ki += 1
        b = 0.1 * jax.random.normal(keys[ki], (1, widths[i + 1]), jnp.float32); ki += 1
        wf = np.zeros((C_SLAB, C_SLAB), np.float32)
        wf[offs[i]:offs[i] + widths[i],
           offs[i + 1]:offs[i + 1] + widths[i + 1]] = np.asarray(w)
        bp = np.zeros((1, C_SLAB), np.float32)
        bp[:, offs[i + 1]:offs[i + 1] + widths[i + 1]] = np.asarray(b)
        params[f"Wg{i+1}f"] = jnp.asarray(wf, jnp.bfloat16)
        params[f"bg{i+1}p"] = jnp.asarray(bp, jnp.float32)

    L1 = k - K + 1
    Lp = L1 // 2
    L2 = Lp - K + 1
    assert L2 >= 1, "sortpool_k too small for the conv/pool stack"
    c2 = 2 * c1

    # conv1d_1: torch weight [C1, C_total, K] -> per-tap, lane-padded [K, 128, C1]
    w = np.asarray(0.3 * jax.random.normal(keys[ki], (c1, C_total, K), jnp.float32)); ki += 1
    wc1 = np.zeros((K, C_SLAB, c1), np.float32)
    for t in range(K):
        wc1[t, :C_total, :] = w[:, :, t].T
    params["Wc1t"] = jnp.asarray(wc1, jnp.bfloat16)
    params["bc1"] = 0.1 * jax.random.normal(keys[ki], (1, c1), jnp.float32); ki += 1

    # conv1d_2: torch weight [C2, C1, K] -> per-tap [K, C1, C2]
    w = np.asarray(0.3 * jax.random.normal(keys[ki], (c2, c1, K), jnp.float32)); ki += 1
    params["Wc2t"] = jnp.asarray(np.transpose(w, (2, 1, 0)), jnp.bfloat16)
    params["bc2"] = 0.1 * jax.random.normal(keys[ki], (1, c2), jnp.float32); ki += 1

    # dense1: torch weight [DH, C2*L2] (channel-major flatten) -> length-major [L2*C2, DH]
    w = np.asarray(0.3 * jax.random.normal(keys[ki], (dh, c2 * L2), jnp.float32)); ki += 1
    wd1 = np.transpose(w.reshape(dh, c2, L2), (2, 1, 0)).reshape(L2 * c2, dh)
    params["Wd1f"] = jnp.asarray(wd1, jnp.bfloat16)
    params["bd1"] = 0.1 * jax.random.normal(keys[ki], (1, dh), jnp.float32); ki += 1

    # dense2: torch weight [OC, DH] -> [DH, 128] lane-padded (sliced back in glue)
    w = np.asarray(0.3 * jax.random.normal(keys[ki], (out_ch, dh), jnp.float32)); ki += 1
    wd2 = np.zeros((dh, OC_PAD), np.float32)
    wd2[:, :out_ch] = w.T
    params["Wd2p"] = jnp.asarray(wd2, jnp.bfloat16)
    b = np.asarray(0.1 * jax.random.normal(keys[ki], (1, out_ch), jnp.float32)); ki += 1
    bp = np.zeros((1, OC_PAD), np.float32)
    bp[:, :out_ch] = b
    params["bd2p"] = jnp.asarray(bp, jnp.float32)

    # Host-precomputed selection matrices (maxpool even-row select; conv2 valid-row
    # + flatten select), bf16 constants whose blocks are pinned across grid steps.
    G = group
    R1 = G * k - K + 1
    R2 = G * Lp - K + 1
    s2 = np.zeros((G * Lp, R1 - 1), np.float32)
    for g in range(G):
        for p in range(Lp):
            s2[g * Lp + p, g * k + 2 * p] = 1.0
    selF = np.zeros((L2 * G, R2), np.float32)
    for l in range(L2):
        for g in range(G):
            selF[l * G + g, g * Lp + l] = 1.0
    params["S2"] = jnp.asarray(s2, jnp.bfloat16)
    params["SelF"] = jnp.asarray(selF, jnp.bfloat16)

    return params, C_total


# ----------------------------------- Main ------------------------------------
if __name__ == "__main__":
    key = jax.random.PRNGKey(0)
    in_ch, hid, out_ch = 4, 8, 3
    num_gcn = 4
    sortpool_k = 16
    conv1d_channels, conv1d_kernel_size, dense_hidden = 8, 5, 32
    group = 8                                   # graphs per CNN-head grid step (8-aligned)

    # Two small path graphs: 7 + 9 = 16 nodes, undirected edges, sorted batch.
    sizes = [7, 9]
    N, B = sum(sizes), len(sizes)
    src, dst = [], []
    off = 0
    for s in sizes:
        for j in range(s - 1):
            src += [off + j, off + j + 1]
            dst += [off + j + 1, off + j]
        off += s
    edge_index = np.stack([np.array(src, np.int64), np.array(dst, np.int64)])

    kx, kp = jax.random.split(key)
    x_np = np.asarray(jax.random.normal(kx, (N, in_ch), jnp.float32))
    params, C_total = init_params(kp, in_ch, hid, out_ch, num_gcn, sortpool_k,
                                  conv1d_channels, conv1d_kernel_size,
                                  dense_hidden, group)

    a_pad, x_pad, counts = build_batched_inputs(x_np, edge_index, sizes)

    logits = dgcnn_forward(params, a_pad, x_pad, counts,
                           k=sortpool_k, group=group,
                           out_channels=out_ch, key_col=C_total - 1)
    logits = jax.block_until_ready(logits)

    assert logits.shape == (B, out_ch)
    assert np.all(np.isfinite(np.asarray(logits)))
    print("KERNEL_OK")
</pallas_src>

<mosaic_0001>
module attributes {stable_mosaic.version = 11 : i64} {
  func.func @gcn_stack_kernel(%arg0: i32, %arg1: memref<1x16x16xbf16, #tpu.memory_space<vmem>>, %arg2: memref<1x16x128xf32, #tpu.memory_space<vmem>>, %arg3: memref<128x128xbf16, #tpu.memory_space<vmem>>, %arg4: memref<1x128xf32, #tpu.memory_space<vmem>>, %arg5: memref<128x128xbf16, #tpu.memory_space<vmem>>, %arg6: memref<1x128xf32, #tpu.memory_space<vmem>>, %arg7: memref<128x128xbf16, #tpu.memory_space<vmem>>, %arg8: memref<1x128xf32, #tpu.memory_space<vmem>>, %arg9: memref<128x128xbf16, #tpu.memory_space<vmem>>, %arg10: memref<1x128xf32, #tpu.memory_space<vmem>>, %arg11: memref<1x16x128xf32, #tpu.memory_space<vmem>>) attributes {dimension_semantics = [#tpu.dimension_semantics<parallel>], iteration_bounds = array<i64: 2>, scalar_prefetch = 0 : i64, scratch_operands = 0 : i64, tpu.core_type = #tpu.core_type<tc>, window_params = [{transform_indices = @transform_0, window_bounds = array<i64: 1, 16, 16>}, {transform_indices = @transform_1, window_bounds = array<i64: 1, 16, 128>}, {pipeline_mode = #tpu.pipeline_mode<synchronous>, transform_indices = @transform_2, window_bounds = array<i64: 128, 128>}, {pipeline_mode = #tpu.pipeline_mode<synchronous>, transform_indices = @transform_3, window_bounds = array<i64: 1, 128>}, {pipeline_mode = #tpu.pipeline_mode<synchronous>, transform_indices = @transform_4, window_bounds = array<i64: 128, 128>}, {pipeline_mode = #tpu.pipeline_mode<synchronous>, transform_indices = @transform_5, window_bounds = array<i64: 1, 128>}, {pipeline_mode = #tpu.pipeline_mode<synchronous>, transform_indices = @transform_6, window_bounds = array<i64: 128, 128>}, {pipeline_mode = #tpu.pipeline_mode<synchronous>, transform_indices = @transform_7, window_bounds = array<i64: 1, 128>}, {pipeline_mode = #tpu.pipeline_mode<synchronous>, transform_indices = @transform_8, window_bounds = array<i64: 128, 128>}, {pipeline_mode = #tpu.pipeline_mode<synchronous>, transform_indices = @transform_9, window_bounds = array<i64: 1, 128>}, {transform_indices = @transform_10, window_bounds = array<i64: 1, 16, 128>}]} {
    %c0 = arith.constant 0 : index
    %c0_0 = arith.constant 0 : index
    %c0_1 = arith.constant 0 : index
    %0 = vector.load %arg1[%c0, %c0_0, %c0_1] : memref<1x16x16xbf16, #tpu.memory_space<vmem>>, vector<1x16x16xbf16>
    %1 = vector.shape_cast %0 : vector<1x16x16xbf16> to vector<16x16xbf16>
    %c0_2 = arith.constant 0 : index
    %c0_3 = arith.constant 0 : index
    %c0_4 = arith.constant 0 : index
    %2 = vector.load %arg2[%c0_2, %c0_3, %c0_4] : memref<1x16x128xf32, #tpu.memory_space<vmem>>, vector<1x16x128xf32>
    %3 = vector.shape_cast %2 : vector<1x16x128xf32> to vector<16x128xf32>
    %4 = arith.truncf %3 : vector<16x128xf32> to vector<16x128xbf16>
    %c0_5 = arith.constant 0 : index
    %c0_6 = arith.constant 0 : index
    %5 = vector.load %arg3[%c0_5, %c0_6] : memref<128x128xbf16, #tpu.memory_space<vmem>>, vector<128x128xbf16>
    %cst = arith.constant dense<0.000000e+00> : vector<16x128xf32>
    %6 = tpu.matmul %4, %5, %cst {dimension_numbers = #tpu.dot_dimension_numbers<[1], [0], [0], [1], [0, 0, 1, 1], [], []>} : vector<16x128xbf16>, vector<128x128xbf16>, vector<16x128xf32> -> vector<16x128xf32>
    %7 = arith.truncf %6 : vector<16x128xf32> to vector<16x128xbf16>
    %cst_7 = arith.constant dense<0.000000e+00> : vector<16x128xf32>
    %8 = tpu.matmul %1, %7, %cst_7 {dimension_numbers = #tpu.dot_dimension_numbers<[1], [0], [0], [1], [0, 0, 1, 1], [], []>} : vector<16x16xbf16>, vector<16x128xbf16>, vector<16x128xf32> -> vector<16x128xf32>
    %c0_8 = arith.constant 0 : index
    %c0_9 = arith.constant 0 : index
    %9 = vector.load %arg4[%c0_8, %c0_9] : memref<1x128xf32, #tpu.memory_space<vmem>>, vector<1x128xf32>
    %10 = vector.broadcast %9 : vector<1x128xf32> to vector<16x128xf32>
    %11 = arith.addf %8, %10 : vector<16x128xf32>
    %12 = math.tanh %11 : vector<16x128xf32>
    %13 = arith.truncf %12 : vector<16x128xf32> to vector<16x128xbf16>
    %c0_10 = arith.constant 0 : index
    %c0_11 = arith.constant 0 : index
    %14 = vector.load %arg5[%c0_10, %c0_11] : memref<128x128xbf16, #tpu.memory_space<vmem>>, vector<128x128xbf16>
    %cst_12 = arith.constant dense<0.000000e+00> : vector<16x128xf32>
    %15 = tpu.matmul %13, %14, %cst_12 {dimension_numbers = #tpu.dot_dimension_numbers<[1], [0], [0], [1], [0, 0, 1, 1], [], []>} : vector<16x128xbf16>, vector<128x128xbf16>, vector<16x128xf32> -> vector<16x128xf32>
    %16 = arith.truncf %15 : vector<16x128xf32> to vector<16x128xbf16>
    %cst_13 = arith.constant dense<0.000000e+00> : vector<16x128xf32>
    %17 = tpu.matmul %1, %16, %cst_13 {dimension_numbers = #tpu.dot_dimension_numbers<[1], [0], [0], [1], [0, 0, 1, 1], [], []>} : vector<16x16xbf16>, vector<16x128xbf16>, vector<16x128xf32> -> vector<16x128xf32>
    %c0_14 = arith.constant 0 : index
    %c0_15 = arith.constant 0 : index
    %18 = vector.load %arg6[%c0_14, %c0_15] : memref<1x128xf32, #tpu.memory_space<vmem>>, vector<1x128xf32>
    %19 = vector.broadcast %18 : vector<1x128xf32> to vector<16x128xf32>
    %20 = arith.addf %17, %19 : vector<16x128xf32>
    %21 = math.tanh %20 : vector<16x128xf32>
    %22 = arith.truncf %21 : vector<16x128xf32> to vector<16x128xbf16>
    %c0_16 = arith.constant 0 : index
    %c0_17 = arith.constant 0 : index
    %23 = vector.load %arg7[%c0_16, %c0_17] : memref<128x128xbf16, #tpu.memory_space<vmem>>, vector<128x128xbf16>
    %cst_18 = arith.constant dense<0.000000e+00> : vector<16x128xf32>
    %24 = tpu.matmul %22, %23, %cst_18 {dimension_numbers = #tpu.dot_dimension_numbers<[1], [0], [0], [1], [0, 0, 1, 1], [], []>} : vector<16x128xbf16>, vector<128x128xbf16>, vector<16x128xf32> -> vector<16x128xf32>
    %25 = arith.truncf %24 : vector<16x128xf32> to vector<16x128xbf16>
    %cst_19 = arith.constant dense<0.000000e+00> : vector<16x128xf32>
    %26 = tpu.matmul %1, %25, %cst_19 {dimension_numbers = #tpu.dot_dimension_numbers<[1], [0], [0], [1], [0, 0, 1, 1], [], []>} : vector<16x16xbf16>, vector<16x128xbf16>, vector<16x128xf32> -> vector<16x128xf32>
    %c0_20 = arith.constant 0 : index
    %c0_21 = arith.constant 0 : index
    %27 = vector.load %arg8[%c0_20, %c0_21] : memref<1x128xf32, #tpu.memory_space<vmem>>, vector<1x128xf32>
    %28 = vector.broadcast %27 : vector<1x128xf32> to vector<16x128xf32>
    %29 = arith.addf %26, %28 : vector<16x128xf32>
    %30 = math.tanh %29 : vector<16x128xf32>
    %31 = arith.truncf %30 : vector<16x128xf32> to vector<16x128xbf16>
    %c0_22 = arith.constant 0 : index
    %c0_23 = arith.constant 0 : index
    %32 = vector.load %arg9[%c0_22, %c0_23] : memref<128x128xbf16, #tpu.memory_space<vmem>>, vector<128x128xbf16>
    %cst_24 = arith.constant dense<0.000000e+00> : vector<16x128xf32>
    %33 = tpu.matmul %31, %32, %cst_24 {dimension_numbers = #tpu.dot_dimension_numbers<[1], [0], [0], [1], [0, 0, 1, 1], [], []>} : vector<16x128xbf16>, vector<128x128xbf16>, vector<16x128xf32> -> vector<16x128xf32>
    %34 = arith.truncf %33 : vector<16x128xf32> to vector<16x128xbf16>
    %cst_25 = arith.constant dense<0.000000e+00> : vector<16x128xf32>
    %35 = tpu.matmul %1, %34, %cst_25 {dimension_numbers = #tpu.dot_dimension_numbers<[1], [0], [0], [1], [0, 0, 1, 1], [], []>} : vector<16x16xbf16>, vector<16x128xbf16>, vector<16x128xf32> -> vector<16x128xf32>
    %c0_26 = arith.constant 0 : index
    %c0_27 = arith.constant 0 : index
    %36 = vector.load %arg10[%c0_26, %c0_27] : memref<1x128xf32, #tpu.memory_space<vmem>>, vector<1x128xf32>
    %37 = vector.broadcast %36 : vector<1x128xf32> to vector<16x128xf32>
    %38 = arith.addf %35, %37 : vector<16x128xf32>
    %39 = arith.addf %3, %12 : vector<16x128xf32>
    %40 = arith.addf %39, %21 : vector<16x128xf32>
    %41 = arith.addf %40, %30 : vector<16x128xf32>
    %42 = arith.addf %41, %38 : vector<16x128xf32>
    %c0_28 = arith.constant 0 : index
    %c0_29 = arith.constant 0 : index
    %c0_30 = arith.constant 0 : index
    %43 = vector.load %arg11[%c0_28, %c0_29, %c0_30] : memref<1x16x128xf32, #tpu.memory_space<vmem>>, vector<1x16x128xf32>
    %44 = vector.shape_cast %43 : vector<1x16x128xf32> to vector<16x128xf32>
    %45 = vector.shape_cast %42 : vector<16x128xf32> to vector<1x16x128xf32>
    tpu.vector_store %arg11[%c0_28, %c0_29, %c0_30], %45 {strides = array<i32>} : memref<1x16x128xf32, #tpu.memory_space<vmem>>, vector<1x16x128xf32>,
    return
  }
  func.func @transform_0(%arg0: i32) -> (i32, i32, i32) {
    %c0_i32 = arith.constant 0 : i32
    %c0_i32_0 = arith.constant 0 : i32
    %c0_i32_1 = arith.constant 0 : i32
    return %arg0, %c0_i32, %c0_i32_0 : i32, i32, i32
  }
  func.func @transform_1(%arg0: i32) -> (i32, i32, i32) {
    %c0_i32 = arith.constant 0 : i32
    %c0_i32_0 = arith.constant 0 : i32
    %c0_i32_1 = arith.constant 0 : i32
    return %arg0, %c0_i32, %c0_i32_0 : i32, i32, i32
  }
  func.func @transform_2(%arg0: i32) -> (i32, i32) {
    %c0_i32 = arith.constant 0 : i32
    %c0_i32_0 = arith.constant 0 : i32
    %c0_i32_1 = arith.constant 0 : i32
    return %c0_i32, %c0_i32_0 : i32, i32
  }
  func.func @transform_3(%arg0: i32) -> (i32, i32) {
    %c0_i32 = arith.constant 0 : i32
    %c0_i32_0 = arith.constant 0 : i32
    %c0_i32_1 = arith.constant 0 : i32
    return %c0_i32, %c0_i32_0 : i32, i32
  }
  func.func @transform_4(%arg0: i32) -> (i32, i32) {
    %c0_i32 = arith.constant 0 : i32
    %c0_i32_0 = arith.constant 0 : i32
    %c0_i32_1 = arith.constant 0 : i32
    return %c0_i32, %c0_i32_0 : i32, i32
  }
  func.func @transform_5(%arg0: i32) -> (i32, i32) {
    %c0_i32 = arith.constant 0 : i32
    %c0_i32_0 = arith.constant 0 : i32
    %c0_i32_1 = arith.constant 0 : i32
    return %c0_i32, %c0_i32_0 : i32, i32
  }
  func.func @transform_6(%arg0: i32) -> (i32, i32) {
    %c0_i32 = arith.constant 0 : i32
    %c0_i32_0 = arith.constant 0 : i32
    %c0_i32_1 = arith.constant 0 : i32
    return %c0_i32, %c0_i32_0 : i32, i32
  }
  func.func @transform_7(%arg0: i32) -> (i32, i32) {
    %c0_i32 = arith.constant 0 : i32
    %c0_i32_0 = arith.constant 0 : i32
    %c0_i32_1 = arith.constant 0 : i32
    return %c0_i32, %c0_i32_0 : i32, i32
  }
  func.func @transform_8(%arg0: i32) -> (i32, i32) {
    %c0_i32 = arith.constant 0 : i32
    %c0_i32_0 = arith.constant 0 : i32
    %c0_i32_1 = arith.constant 0 : i32
    return %c0_i32, %c0_i32_0 : i32, i32
  }
  func.func @transform_9(%arg0: i32) -> (i32, i32) {
    %c0_i32 = arith.constant 0 : i32
    %c0_i32_0 = arith.constant 0 : i32
    %c0_i32_1 = arith.constant 0 : i32
    return %c0_i32, %c0_i32_0 : i32, i32
  }
  func.func @transform_10(%arg0: i32) -> (i32, i32, i32) {
    %c0_i32 = arith.constant 0 : i32
    %c0_i32_0 = arith.constant 0 : i32
    %c0_i32_1 = arith.constant 0 : i32
    return %arg0, %c0_i32, %c0_i32_0 : i32, i32, i32
  }
}

module attributes {stable_mosaic.version = 11 : i64} {
  func.func @cnn_head_kernel(%arg0: i32, %arg1: memref<128x128xbf16, #tpu.memory_space<vmem>>, %arg2: memref<5x128x8xbf16, #tpu.memory_space<vmem>>, %arg3: memref<1x8xf32, #tpu.memory_space<vmem>>, %arg4: memref<48x123xbf16, #tpu.memory_space<vmem>>, %arg5: memref<5x8x16xbf16, #tpu.memory_space<vmem>>, %arg6: memref<1x16xf32, #tpu.memory_space<vmem>>, %arg7: memref<16x44xbf16, #tpu.memory_space<vmem>>, %arg8: memref<32x32xbf16, #tpu.memory_space<vmem>>, %arg9: memref<1x32xf32, #tpu.memory_space<vmem>>, %arg10: memref<32x128xbf16, #tpu.memory_space<vmem>>, %arg11: memref<1x128xf32, #tpu.memory_space<vmem>>, %arg12: memref<8x128xf32, #tpu.memory_space<vmem>>) attributes {dimension_semantics = [#tpu.dimension_semantics<parallel>], iteration_bounds = array<i64: 1>, scalar_prefetch = 0 : i64, scratch_operands = 0 : i64, tpu.core_type = #tpu.core_type<tc>, window_params = [{transform_indices = @transform_0, window_bounds = array<i64: 128, 128>}, {pipeline_mode = #tpu.pipeline_mode<synchronous>, transform_indices = @transform_1, window_bounds = array<i64: 5, 128, 8>}, {pipeline_mode = #tpu.pipeline_mode<synchronous>, transform_indices = @transform_2, window_bounds = array<i64: 1, 8>}, {pipeline_mode = #tpu.pipeline_mode<synchronous>, transform_indices = @transform_3, window_bounds = array<i64: 48, 123>}, {pipeline_mode = #tpu.pipeline_mode<synchronous>, transform_indices = @transform_4, window_bounds = array<i64: 5, 8, 16>}, {pipeline_mode = #tpu.pipeline_mode<synchronous>, transform_indices = @transform_5, window_bounds = array<i64: 1, 16>}, {pipeline_mode = #tpu.pipeline_mode<synchronous>, transform_indices = @transform_6, window_bounds = array<i64: 16, 44>}, {pipeline_mode = #tpu.pipeline_mode<synchronous>, transform_indices = @transform_7, window_bounds = array<i64: 32, 32>}, {pipeline_mode = #tpu.pipeline_mode<synchronous>, transform_indices = @transform_8, window_bounds = array<i64: 1, 32>}, {pipeline_mode = #tpu.pipeline_mode<synchronous>, transform_indices = @transform_9, window_bounds = array<i64: 32, 128>}, {pipeline_mode = #tpu.pipeline_mode<synchronous>, transform_indices = @transform_10, window_bounds = array<i64: 1, 128>}, {transform_indices = @transform_11, window_bounds = array<i64: 8, 128>}]} {
    %c0 = arith.constant 0 : index
    %c0_0 = arith.constant 0 : index
    %0 = vector.load %arg1[%c0, %c0_0] : memref<128x128xbf16, #tpu.memory_space<vmem>>, vector<128x128xbf16>
    %cst = arith.constant 0.000000e+00 : f32
    %1 = vector.broadcast %cst : f32 to vector<124x8xf32>
    %2 = vector.extract_strided_slice %0 {offsets = [0, 0], sizes = [124, 128], strides = [1, 1]} : vector<128x128xbf16> to vector<124x128xbf16>
    %c0_1 = arith.constant 0 : index
    %c0_2 = arith.constant 0 : index
    %c0_3 = arith.constant 0 : index
    %3 = vector.load %arg2[%c0_1, %c0_2, %c0_3] : memref<5x128x8xbf16, #tpu.memory_space<vmem>>, vector<1x128x8xbf16>
    %4 = vector.shape_cast %3 : vector<1x128x8xbf16> to vector<128x8xbf16>
    %cst_4 = arith.constant dense<0.000000e+00> : vector<124x8xf32>
    %5 = tpu.matmul %2, %4, %cst_4 {dimension_numbers = #tpu.dot_dimension_numbers<[1], [0], [0], [1], [0, 0, 1, 1], [], []>} : vector<124x128xbf16>, vector<128x8xbf16>, vector<124x8xf32> -> vector<124x8xf32>
    %6 = arith.addf %1, %5 : vector<124x8xf32>
    %7 = vector.extract_strided_slice %0 {offsets = [1, 0], sizes = [124, 128], strides = [1, 1]} : vector<128x128xbf16> to vector<124x128xbf16>
    %c1 = arith.constant 1 : index
    %c0_5 = arith.constant 0 : index
    %c0_6 = arith.constant 0 : index
    %8 = vector.load %arg2[%c1, %c0_5, %c0_6] : memref<5x128x8xbf16, #tpu.memory_space<vmem>>, vector<1x128x8xbf16>
    %9 = vector.shape_cast %8 : vector<1x128x8xbf16> to vector<128x8xbf16>
    %cst_7 = arith.constant dense<0.000000e+00> : vector<124x8xf32>
    %10 = tpu.matmul %7, %9, %cst_7 {dimension_numbers = #tpu.dot_dimension_numbers<[1], [0], [0], [1], [0, 0, 1, 1], [], []>} : vector<124x128xbf16>, vector<128x8xbf16>, vector<124x8xf32> -> vector<124x8xf32>
    %11 = arith.addf %6, %10 : vector<124x8xf32>
    %12 = vector.extract_strided_slice %0 {offsets = [2, 0], sizes = [124, 128], strides = [1, 1]} : vector<128x128xbf16> to vector<124x128xbf16>
    %c2 = arith.constant 2 : index
    %c0_8 = arith.constant 0 : index
    %c0_9 = arith.constant 0 : index
    %13 = vector.load %arg2[%c2, %c0_8, %c0_9] : memref<5x128x8xbf16, #tpu.memory_space<vmem>>, vector<1x128x8xbf16>
    %14 = vector.shape_cast %13 : vector<1x128x8xbf16> to vector<128x8xbf16>
    %cst_10 = arith.constant dense<0.000000e+00> : vector<124x8xf32>
    %15 = tpu.matmul %12, %14, %cst_10 {dimension_numbers = #tpu.dot_dimension_numbers<[1], [0], [0], [1], [0, 0, 1, 1], [], []>} : vector<124x128xbf16>, vector<128x8xbf16>, vector<124x8xf32> -> vector<124x8xf32>
    %16 = arith.addf %11, %15 : vector<124x8xf32>
    %17 = vector.extract_strided_slice %0 {offsets = [3, 0], sizes = [124, 128], strides = [1, 1]} : vector<128x128xbf16> to vector<124x128xbf16>
    %c3 = arith.constant 3 : index
    %c0_11 = arith.constant 0 : index
    %c0_12 = arith.constant 0 : index
    %18 = vector.load %arg2[%c3, %c0_11, %c0_12] : memref<5x128x8xbf16, #tpu.memory_space<vmem>>, vector<1x128x8xbf16>
    %19 = vector.shape_cast %18 : vector<1x128x8xbf16> to vector<128x8xbf16>
    %cst_13 = arith.constant dense<0.000000e+00> : vector<124x8xf32>
    %20 = tpu.matmul %17, %19, %cst_13 {dimension_numbers = #tpu.dot_dimension_numbers<[1], [0], [0], [1], [0, 0, 1, 1], [], []>} : vector<124x128xbf16>, vector<128x8xbf16>, vector<124x8xf32> -> vector<124x8xf32>
    %21 = arith.addf %16, %20 : vector<124x8xf32>
    %22 = vector.extract_strided_slice %0 {offsets = [4, 0], sizes = [124, 128], strides = [1, 1]} : vector<128x128xbf16> to vector<124x128xbf16>
    %c4 = arith.constant 4 : index
    %c0_14 = arith.constant 0 : index
    %c0_15 = arith.constant 0 : index
    %23 = vector.load %arg2[%c4, %c0_14, %c0_15] : memref<5x128x8xbf16, #tpu.memory_space<vmem>>, vector<1x128x8xbf16>
    %24 = vector.shape_cast %23 : vector<1x128x8xbf16> to vector<128x8xbf16>
    %cst_16 = arith.constant dense<0.000000e+00> : vector<124x8xf32>
    %25 = tpu.matmul %22, %24, %cst_16 {dimension_numbers = #tpu.dot_dimension_numbers<[1], [0], [0], [1], [0, 0, 1, 1], [], []>} : vector<124x128xbf16>, vector<128x8xbf16>, vector<124x8xf32> -> vector<124x8xf32>
    %26 = arith.addf %21, %25 : vector<124x8xf32>
    %c0_17 = arith.constant 0 : index
    %c0_18 = arith.constant 0 : index
    %27 = vector.load %arg3[%c0_17, %c0_18] : memref<1x8xf32, #tpu.memory_space<vmem>>, vector<1x8xf32>
    %28 = vector.broadcast %27 : vector<1x8xf32> to vector<124x8xf32>
    %29 = arith.addf %26, %28 : vector<124x8xf32>
    %cst_19 = arith.constant 0.000000e+00 : f32
    %30 = vector.broadcast %cst_19 : f32 to vector<124x8xf32>
    %31 = arith.maximumf %29, %30 : vector<124x8xf32>
    %32 = vector.extract_strided_slice %31 {offsets = [0, 0], sizes = [123, 8], strides = [1, 1]} : vector<124x8xf32> to vector<123x8xf32>
    %33 = vector.extract_strided_slice %31 {offsets = [1, 0], sizes = [123, 8], strides = [1, 1]} : vector<124x8xf32> to vector<123x8xf32>
    %34 = arith.maximumf %32, %33 : vector<123x8xf32>
    %c0_20 = arith.constant 0 : index
    %c0_21 = arith.constant 0 : index
    %35 = vector.load %arg4[%c0_20, %c0_21] : memref<48x123xbf16, #tpu.memory_space<vmem>>, vector<48x123xbf16>
    %36 = arith.truncf %34 : vector<123x8xf32> to vector<123x8xbf16>
    %cst_22 = arith.constant dense<0.000000e+00> : vector<48x8xf32>
    %37 = tpu.matmul %35, %36, %cst_22 {dimension_numbers = #tpu.dot_dimension_numbers<[1], [0], [0], [1], [0, 0, 1, 1], [], []>} : vector<48x123xbf16>, vector<123x8xbf16>, vector<48x8xf32> -> vector<48x8xf32>
    %38 = arith.truncf %37 : vector<48x8xf32> to vector<48x8xbf16>
    %cst_23 = arith.constant 0.000000e+00 : f32
    %39 = vector.broadcast %cst_23 : f32 to vector<44x16xf32>
    %40 = vector.extract_strided_slice %38 {offsets = [0, 0], sizes = [44, 8], strides = [1, 1]} : vector<48x8xbf16> to vector<44x8xbf16>
    %c0_24 = arith.constant 0 : index
    %c0_25 = arith.constant 0 : index
    %c0_26 = arith.constant 0 : index
    %41 = vector.load %arg5[%c0_24, %c0_25, %c0_26] : memref<5x8x16xbf16, #tpu.memory_space<vmem>>, vector<1x8x16xbf16>
    %42 = vector.shape_cast %41 : vector<1x8x16xbf16> to vector<8x16xbf16>
    %cst_27 = arith.constant dense<0.000000e+00> : vector<44x16xf32>
    %43 = tpu.matmul %40, %42, %cst_27 {dimension_numbers = #tpu.dot_dimension_numbers<[1], [0], [0], [1], [0, 0, 1, 1], [], []>} : vector<44x8xbf16>, vector<8x16xbf16>, vector<44x16xf32> -> vector<44x16xf32>
    %44 = arith.addf %39, %43 : vector<44x16xf32>
    %45 = vector.extract_strided_slice %38 {offsets = [1, 0], sizes = [44, 8], strides = [1, 1]} : vector<48x8xbf16> to vector<44x8xbf16>
    %c1_28 = arith.constant 1 : index
    %c0_29 = arith.constant 0 : index
    %c0_30 = arith.constant 0 : index
    %46 = vector.load %arg5[%c1_28, %c0_29, %c0_30] : memref<5x8x16xbf16, #tpu.memory_space<vmem>>, vector<1x8x16xbf16>
    %47 = vector.shape_cast %46 : vector<1x8x16xbf16> to vector<8x16xbf16>
    %cst_31 = arith.constant dense<0.000000e+00> : vector<44x16xf32>
    %48 = tpu.matmul %45, %47, %cst_31 {dimension_numbers = #tpu.dot_dimension_numbers<[1], [0], [0], [1], [0, 0, 1, 1], [], []>} : vector<44x8xbf16>, vector<8x16xbf16>, vector<44x16xf32> -> vector<44x16xf32>
    %49 = arith.addf %44, %48 : vector<44x16xf32>
    %50 = vector.extract_strided_slice %38 {offsets = [2, 0], sizes = [44, 8], strides = [1, 1]} : vector<48x8xbf16> to vector<44x8xbf16>
    %c2_32 = arith.constant 2 : index
    %c0_33 = arith.constant 0 : index
    %c0_34 = arith.constant 0 : index
    %51 = vector.load %arg5[%c2_32, %c0_33, %c0_34] : memref<5x8x16xbf16, #tpu.memory_space<vmem>>, vector<1x8x16xbf16>
    %52 = vector.shape_cast %51 : vector<1x8x16xbf16> to vector<8x16xbf16>
    %cst_35 = arith.constant dense<0.000000e+00> : vector<44x16xf32>
    %53 = tpu.matmul %50, %52, %cst_35 {dimension_numbers = #tpu.dot_dimension_numbers<[1], [0], [0], [1], [0, 0, 1, 1], [], []>} : vector<44x8xbf16>, vector<8x16xbf16>, vector<44x16xf32> -> vector<44x16xf32>
    %54 = arith.addf %49, %53 : vector<44x16xf32>
    %55 = vector.extract_strided_slice %38 {offsets = [3, 0], sizes = [44, 8], strides = [1, 1]} : vector<48x8xbf16> to vector<44x8xbf16>
    %c3_36 = arith.constant 3 : index
    %c0_37 = arith.constant 0 : index
    %c0_38 = arith.constant 0 : index
    %56 = vector.load %arg5[%c3_36, %c0_37, %c0_38] : memref<5x8x16xbf16, #tpu.memory_space<vmem>>, vector<1x8x16xbf16>
    %57 = vector.shape_cast %56 : vector<1x8x16xbf16> to vector<8x16xbf16>
    %cst_39 = arith.constant dense<0.000000e+00> : vector<44x16xf32>
    %58 = tpu.matmul %55, %57, %cst_39 {dimension_numbers = #tpu.dot_dimension_numbers<[1], [0], [0], [1], [0, 0, 1, 1], [], []>} : vector<44x8xbf16>, vector<8x16xbf16>, vector<44x16xf32> -> vector<44x16xf32>
    %59 = arith.addf %54, %58 : vector<44x16xf32>
    %60 = vector.extract_strided_slice %38 {offsets = [4, 0], sizes = [44, 8], strides = [1, 1]} : vector<48x8xbf16> to vector<44x8xbf16>
    %c4_40 = arith.constant 4 : index
    %c0_41 = arith.constant 0 : index
    %c0_42 = arith.constant 0 : index
    %61 = vector.load %arg5[%c4_40, %c0_41, %c0_42] : memref<5x8x16xbf16, #tpu.memory_space<vmem>>, vector<1x8x16xbf16>
    %62 = vector.shape_cast %61 : vector<1x8x16xbf16> to vector<8x16xbf16>
    %cst_43 = arith.constant dense<0.000000e+00> : vector<44x16xf32>
    %63 = tpu.matmul %60, %62, %cst_43 {dimension_numbers = #tpu.dot_dimension_numbers<[1], [0], [0], [1], [0, 0, 1, 1], [], []>} : vector<44x8xbf16>, vector<8x16xbf16>, vector<44x16xf32> -> vector<44x16xf32>
    %64 = arith.addf %59, %63 : vector<44x16xf32>
    %c0_44 = arith.constant 0 : index
    %c0_45 = arith.constant 0 : index
    %65 = vector.load %arg6[%c0_44, %c0_45] : memref<1x16xf32, #tpu.memory_space<vmem>>, vector<1x16xf32>
    %66 = vector.broadcast %65 : vector<1x16xf32> to vector<44x16xf32>
    %67 = arith.addf %64, %66 : vector<44x16xf32>
    %cst_46 = arith.constant 0.000000e+00 : f32
    %68 = vector.broadcast %cst_46 : f32 to vector<44x16xf32>
    %69 = arith.maximumf %67, %68 : vector<44x16xf32>
    %70 = arith.truncf %69 : vector<44x16xf32> to vector<44x16xbf16>
    %cst_47 = arith.constant 0.000000e+00 : f32
    %71 = vector.broadcast %cst_47 : f32 to vector<8x32xf32>
    %c0_48 = arith.constant 0 : index
    %c0_49 = arith.constant 0 : index
    %72 = vector.load %arg7[%c0_48, %c0_49] : memref<16x44xbf16, #tpu.memory_space<vmem>>, vector<8x44xbf16>
    %cst_50 = arith.constant dense<0.000000e+00> : vector<8x16xf32>
    %73 = tpu.matmul %72, %70, %cst_50 {dimension_numbers = #tpu.dot_dimension_numbers<[1], [0], [0], [1], [0, 0, 1, 1], [], []>} : vector<8x44xbf16>, vector<44x16xbf16>, vector<8x16xf32> -> vector<8x16xf32>
    %74 = arith.truncf %73 : vector<8x16xf32> to vector<8x16xbf16>
    %c0_51 = arith.constant 0 : index
    %c0_52 = arith.constant 0 : index
    %75 = vector.load %arg8[%c0_51, %c0_52] : memref<32x32xbf16, #tpu.memory_space<vmem>>, vector<16x32xbf16>
    %cst_53 = arith.constant dense<0.000000e+00> : vector<8x32xf32>
    %76 = tpu.matmul %74, %75, %cst_53 {dimension_numbers = #tpu.dot_dimension_numbers<[1], [0], [0], [1], [0, 0, 1, 1], [], []>} : vector<8x16xbf16>, vector<16x32xbf16>, vector<8x32xf32> -> vector<8x32xf32>
    %77 = arith.addf %71, %76 : vector<8x32xf32>
    %c8 = arith.constant 8 : index
    %c0_54 = arith.constant 0 : index
    %78 = vector.load %arg7[%c8, %c0_54] : memref<16x44xbf16, #tpu.memory_space<vmem>>, vector<8x44xbf16>
    %cst_55 = arith.constant dense<0.000000e+00> : vector<8x16xf32>
    %79 = tpu.matmul %78, %70, %cst_55 {dimension_numbers = #tpu.dot_dimension_numbers<[1], [0], [0], [1], [0, 0, 1, 1], [], []>} : vector<8x44xbf16>, vector<44x16xbf16>, vector<8x16xf32> -> vector<8x16xf32>
    %80 = arith.truncf %79 : vector<8x16xf32> to vector<8x16xbf16>
    %c16 = arith.constant 16 : index
    %c0_56 = arith.constant 0 : index
    %81 = vector.load %arg8[%c16, %c0_56] : memref<32x32xbf16, #tpu.memory_space<vmem>>, vector<16x32xbf16>
    %cst_57 = arith.constant dense<0.000000e+00> : vector<8x32xf32>
    %82 = tpu.matmul %80, %81, %cst_57 {dimension_numbers = #tpu.dot_dimension_numbers<[1], [0], [0], [1], [0, 0, 1, 1], [], []>} : vector<8x16xbf16>, vector<16x32xbf16>, vector<8x32xf32> -> vector<8x32xf32>
    %83 = arith.addf %77, %82 : vector<8x32xf32>
    %c0_58 = arith.constant 0 : index
    %c0_59 = arith.constant 0 : index
    %84 = vector.load %arg9[%c0_58, %c0_59] : memref<1x32xf32, #tpu.memory_space<vmem>>, vector<1x32xf32>
    %85 = vector.broadcast %84 : vector<1x32xf32> to vector<8x32xf32>
    %86 = arith.addf %83, %85 : vector<8x32xf32>
    %cst_60 = arith.constant 0.000000e+00 : f32
    %87 = vector.broadcast %cst_60 : f32 to vector<8x32xf32>
    %88 = arith.maximumf %86, %87 : vector<8x32xf32>
    %89 = arith.truncf %88 : vector<8x32xf32> to vector<8x32xbf16>
    %c0_61 = arith.constant 0 : index
    %c0_62 = arith.constant 0 : index
    %90 = vector.load %arg10[%c0_61, %c0_62] : memref<32x128xbf16, #tpu.memory_space<vmem>>, vector<32x128xbf16>
    %cst_63 = arith.constant dense<0.000000e+00> : vector<8x128xf32>
    %91 = tpu.matmul %89, %90, %cst_63 {dimension_numbers = #tpu.dot_dimension_numbers<[1], [0], [0], [1], [0, 0, 1, 1], [], []>} : vector<8x32xbf16>, vector<32x128xbf16>, vector<8x128xf32> -> vector<8x128xf32>
    %c0_64 = arith.constant 0 : index
    %c0_65 = arith.constant 0 : index
    %92 = vector.load %arg11[%c0_64, %c0_65] : memref<1x128xf32, #tpu.memory_space<vmem>>, vector<1x128xf32>
    %93 = vector.broadcast %92 : vector<1x128xf32> to vector<8x128xf32>
    %94 = arith.addf %91, %93 : vector<8x128xf32>
    %c0_66 = arith.constant 0 : index
    %c0_67 = arith.constant 0 : index
    %95 = vector.load %arg12[%c0_66, %c0_67] : memref<8x128xf32, #tpu.memory_space<vmem>>, vector<8x128xf32>
    tpu.vector_store %arg12[%c0_66, %c0_67], %94 {strides = array<i32>} : memref<8x128xf32, #tpu.memory_space<vmem>>, vector<8x128xf32>,
    return
  }
  func.func @transform_0(%arg0: i32) -> (i32, i32) {
    %c0_i32 = arith.constant 0 : i32
    %c0_i32_0 = arith.constant 0 : i32
    return %arg0, %c0_i32 : i32, i32
  }
  func.func @transform_1(%arg0: i32) -> (i32, i32, i32) {
    %c0_i32 = arith.constant 0 : i32
    %c0_i32_0 = arith.constant 0 : i32
    %c0_i32_1 = arith.constant 0 : i32
    %c0_i32_2 = arith.constant 0 : i32
    return %c0_i32, %c0_i32_0, %c0_i32_1 : i32, i32, i32
  }
  func.func @transform_2(%arg0: i32) -> (i32, i32) {
    %c0_i32 = arith.constant 0 : i32
    %c0_i32_0 = arith.constant 0 : i32
    %c0_i32_1 = arith.constant 0 : i32
    return %c0_i32, %c0_i32_0 : i32, i32
  }
  func.func @transform_3(%arg0: i32) -> (i32, i32) {
    %c0_i32 = arith.constant 0 : i32
    %c0_i32_0 = arith.constant 0 : i32
    %c0_i32_1 = arith.constant 0 : i32
    return %c0_i32, %c0_i32_0 : i32, i32
  }
  func.func @transform_4(%arg0: i32) -> (i32, i32, i32) {
    %c0_i32 = arith.constant 0 : i32
    %c0_i32_0 = arith.constant 0 : i32
    %c0_i32_1 = arith.constant 0 : i32
    %c0_i32_2 = arith.constant 0 : i32
    return %c0_i32, %c0_i32_0, %c0_i32_1 : i32, i32, i32
  }
  func.func @transform_5(%arg0: i32) -> (i32, i32) {
    %c0_i32 = arith.constant 0 : i32
    %c0_i32_0 = arith.constant 0 : i32
    %c0_i32_1 = arith.constant 0 : i32
    return %c0_i32, %c0_i32_0 : i32, i32
  }
  func.func @transform_6(%arg0: i32) -> (i32, i32) {
    %c0_i32 = arith.constant 0 : i32
    %c0_i32_0 = arith.constant 0 : i32
    %c0_i32_1 = arith.constant 0 : i32
    return %c0_i32, %c0_i32_0 : i32, i32
  }
  func.func @transform_7(%arg0: i32) -> (i32, i32) {
    %c0_i32 = arith.constant 0 : i32
    %c0_i32_0 = arith.constant 0 : i32
    %c0_i32_1 = arith.constant 0 : i32
    return %c0_i32, %c0_i32_0 : i32, i32
  }
  func.func @transform_8(%arg0: i32) -> (i32, i32) {
    %c0_i32 = arith.constant 0 : i32
    %c0_i32_0 = arith.constant 0 : i32
    %c0_i32_1 = arith.constant 0 : i32
    return %c0_i32, %c0_i32_0 : i32, i32
  }
  func.func @transform_9(%arg0: i32) -> (i32, i32) {
    %c0_i32 = arith.constant 0 : i32
    %c0_i32_0 = arith.constant 0 : i32
    %c0_i32_1 = arith.constant 0 : i32
    return %c0_i32, %c0_i32_0 : i32, i32
  }
  func.func @transform_10(%arg0: i32) -> (i32, i32) {
    %c0_i32 = arith.constant 0 : i32
    %c0_i32_0 = arith.constant 0 : i32
    %c0_i32_1 = arith.constant 0 : i32
    return %c0_i32, %c0_i32_0 : i32, i32
  }
  func.func @transform_11(%arg0: i32) -> (i32, i32) {
    %c0_i32 = arith.constant 0 : i32
    %c0_i32_0 = arith.constant 0 : i32
    return %arg0, %c0_i32 : i32, i32
  }
}

</mosaic_0001>

<llo_original>
// kernel: dgcnn_forward.2
$region0: #{dgcnn_forward.2}
  #allocation0 [shape = 'u32[]', space=smem, size = 0x4, offset = 0x4, fixed_abs, tag = 'smem constant byte address 0x4 - core index']
  #allocation1 [shape = 'u32[72,128]{1,0:T(1,128)}', space=vmem, size = 0x9000, scoped, tag = 'internal scratch']
  %s0 = inlined_call_operand.hbm [shape: bf16[2,16,16], index: 0, kind: input, shape index: {}]
  %s1 = inlined_call_operand.hbm [shape: f32[2,16,128], index: 1, kind: input, shape index: {}]
  %s2 = inlined_call_operand.hbm [shape: bf16[128,128], index: 2, kind: input, shape index: {}]
  %s3 = inlined_call_operand.hbm [shape: f32[1,128], index: 3, kind: input, shape index: {}]
  %s4 = inlined_call_operand.hbm [shape: bf16[128,128], index: 4, kind: input, shape index: {}]
  %s5 = inlined_call_operand.hbm [shape: f32[1,128], index: 5, kind: input, shape index: {}]
  %s6 = inlined_call_operand.hbm [shape: bf16[128,128], index: 6, kind: input, shape index: {}]
  %s7 = inlined_call_operand.hbm [shape: f32[1,128], index: 7, kind: input, shape index: {}]
  %s8 = inlined_call_operand.hbm [shape: bf16[128,128], index: 8, kind: input, shape index: {}]
  %s9 = inlined_call_operand.hbm [shape: f32[1,128], index: 9, kind: input, shape index: {}]
  %s10 = inlined_call_operand.vmem [shape: f32[2,16,128], index: 10, kind: output, shape index: {}]
  %s11 = sld [smem:[#allocation0]]
  $region113: #{dgcnn_forward.2} parent=0
    _
  %s13 = ssub.s32 1, %s11
  %s14 = scalar_select 0, %s13, %s11
  $region1: #{dgcnn_forward.2} parent=0
    #allocation2 [shape = 'u8[8192]{0}', space=vmem, size = 0x2000, scoped, tag = 'input window, operand 0']
    #allocation3 [shape = 's32[2]{0}', space=sflag, size = 0x8, scoped, tag = 'scoped memory for dgcnn_forward.2']
    #allocation4 [shape = 'u8[16384]{0}', space=vmem, size = 0x4000, scoped, tag = 'input window, operand 1']
    #allocation5 [shape = 's32[2]{0}', space=sflag, size = 0x8, scoped, tag = 'scoped memory for dgcnn_forward.2']
    #allocation6 [shape = 'u8[32768]{0}', space=vmem, size = 0x8000, scoped, tag = 'input window, operand 2, single buffered']
    #allocation7 [shape = 'u8[512]{0}', space=vmem, size = 0x400, scoped, tag = 'input window, operand 3, single buffered']
    #allocation8 [shape = 's32[1]{0}', space=sflag, size = 0x4, scoped, tag = 'scoped memory for dgcnn_forward.2']
    #allocation9 [shape = 'u8[32768]{0}', space=vmem, size = 0x8000, scoped, tag = 'input window, operand 4, single buffered']
    #allocation10 [shape = 'u8[512]{0}', space=vmem, size = 0x400, scoped, tag = 'input window, operand 5, single buffered']
    #allocation11 [shape = 's32[1]{0}', space=sflag, size = 0x4, scoped, tag = 'scoped memory for dgcnn_forward.2']
    #allocation12 [shape = 'u8[32768]{0}', space=vmem, size = 0x8000, scoped, tag = 'input window, operand 6, single buffered']
    #allocation13 [shape = 'u8[512]{0}', space=vmem, size = 0x400, scoped, tag = 'input window, operand 7, single buffered']
    #allocation14 [shape = 's32[1]{0}', space=sflag, size = 0x4, scoped, tag = 'scoped memory for dgcnn_forward.2']
    #allocation15 [shape = 'u8[32768]{0}', space=vmem, size = 0x8000, scoped, tag = 'input window, operand 8, single buffered']
    #allocation16 [shape = 'u8[512]{0}', space=vmem, size = 0x400, scoped, tag = 'input window, operand 9, single buffered']
    #allocation17 [shape = 's32[1]{0}', space=sflag, size = 0x4, scoped, tag = 'scoped memory for dgcnn_forward.2']
    %15 = vsyncpa [#allocation3], 0
    %s16 = scalar_lea.sflag [#allocation3], 1
    %17 = vsyncpa %s16, 0
    %18 = vsyncpa [#allocation5], 0
    %s19 = scalar_lea.sflag [#allocation5], 1
    %20 = vsyncpa %s19, 0
    %21 = vsyncpa [#allocation8], 0
    %22 = vsyncpa [#allocation11], 0
    %23 = vsyncpa [#allocation14], 0
    %24 = vsyncpa [#allocation17], 0
    loop: start=0, step=1, limit=4
    $region2: #{dgcnn_forward.2} parent=1 // loop_pre_header
      _
    $region3: #{dgcnn_forward.2} parent=1 // loop_header
      %s26 = sphi 0, %s30
      %p27 = scmp.ge.s32.totalorder %s26, 4
      %s36 = sphi 0, %s38
      %s39 = sphi 0, %s36
      %s40 = sphi 0, %s39
      %s56 = sphi 0, %s40
      %s62 = sphi 0, %s64
      %s65 = sphi 0, %s62
      %s66 = sphi 0, %s65
      %s82 = sphi 0, %s66
      %s86 = sphi 0, %s86
      %s88 = sphi 0, %s86
      %s89 = sphi 0, %s88
      %s103 = sphi 0, %s89
      %s107 = sphi 0, %s107
      %s109 = sphi 0, %s107
      %s110 = sphi 0, %s109
      %s124 = sphi 0, %s110
      %s128 = sphi 0, %s128
      %s130 = sphi 0, %s128
      %s131 = sphi 0, %s130
      %s145 = sphi 0, %s131
      %s149 = sphi 0, %s149
      %s151 = sphi 0, %s149
      %s152 = sphi 0, %s151
      %s166 = sphi 0, %s152
      %s170 = sphi 0, %s170
      %s172 = sphi 0, %s170
      %s173 = sphi 0, %s172
      %s187 = sphi 0, %s173
      %s191 = sphi 0, %s191
      %s193 = sphi 0, %s191
      %s194 = sphi 0, %s193
      %s208 = sphi 0, %s194
      %s212 = sphi 0, %s212
      %s214 = sphi 0, %s212
      %s215 = sphi 0, %s214
      %s229 = sphi 0, %s215
      %s233 = sphi 0, %s233
      %s235 = sphi 0, %s233
      %s236 = sphi 0, %s235
      %s250 = sphi 0, %s236
      %s256 = sphi 0, %s258
      %s259 = sphi 0, %s256
      %s260 = sphi 0, %s259
      %s276 = sphi 0, %s260
    $region4: #{dgcnn_forward.2} parent=1 // loop_header_branch
      %29 = sbr.rel (%p27) target = $region8
    $region5: #{dgcnn_forward.2} parent=1 // loop_body
      %s31 = ssub.s32 %s26, 1
      %s32 = ssub.s32 %s26, 2
      %s33 = sadd.s32 %s26, 1
      %s34 = ssub.s32 %s26, %s33
      %p35 = scmp.eq.s32.totalorder %s34, 0
      %s37 = sadd.s32 %s36, 1
      %s38 = scalar_select %p35, %s36, %s37
      %p41 = pneg %p35
      %p42 = scmp.eq.s32.totalorder %s26, 1
      %p43 = por %p41, %p42
      %p44 = scmp.ne.s32.totalorder %s36, %s39
      %p45 = scmp.eq.s32.totalorder %s26, 0
      %p46 = por %p44, %p45
      %p47 = scmp.ne.s32.totalorder %s36, %s39
      %p48 = scmp.eq.s32.totalorder %s31, 1
      %p49 = por %p47, %p48
      %p50 = scmp.ne.s32.totalorder %s39, %s40
      %p51 = scmp.eq.s32.totalorder %s31, 0
      %p52 = por %p50, %p51
      %p53 = scmp.ne.s32.totalorder %s39, %s40
      %p54 = scmp.eq.s32.totalorder %s32, 1
      %p55 = por %p53, %p54
      %p57 = scmp.ne.s32.totalorder %s40, %s56
      %p58 = scmp.eq.s32.totalorder %s32, 0
      %p59 = por %p57, %p58
      %s60 = ssub.s32 %s26, %s33
      %p61 = scmp.eq.s32.totalorder %s60, 0
      %s63 = sadd.s32 %s62, 1
      %s64 = scalar_select %p61, %s62, %s63
      %p67 = pneg %p61
      %p68 = scmp.eq.s32.totalorder %s26, 1
      %p69 = por %p67, %p68
      %p70 = scmp.ne.s32.totalorder %s62, %s65
      %p71 = scmp.eq.s32.totalorder %s26, 0
      %p72 = por %p70, %p71
      %p73 = scmp.ne.s32.totalorder %s62, %s65
      %p74 = scmp.eq.s32.totalorder %s31, 1
      %p75 = por %p73, %p74
      %p76 = scmp.ne.s32.totalorder %s65, %s66
      %p77 = scmp.eq.s32.totalorder %s31, 0
      %p78 = por %p76, %p77
      %p79 = scmp.ne.s32.totalorder %s65, %s66
      %p80 = scmp.eq.s32.totalorder %s32, 1
      %p81 = por %p79, %p80
      %p83 = scmp.ne.s32.totalorder %s66, %s82
      %p84 = scmp.eq.s32.totalorder %s32, 0
      %p85 = por %p83, %p84
      %s87 = sadd.s32 %s86, 1
      %p90 = scmp.eq.s32.totalorder %s26, 1
      %p91 = scmp.ne.s32.totalorder %s86, %s88
      %p92 = scmp.eq.s32.totalorder %s26, 0
      %p93 = por %p91, %p92
      %p94 = scmp.ne.s32.totalorder %s86, %s88
      %p95 = scmp.eq.s32.totalorder %s31, 1
      %p96 = por %p94, %p95
      %p97 = scmp.ne.s32.totalorder %s88, %s89
      %p98 = scmp.eq.s32.totalorder %s31, 0
      %p99 = por %p97, %p98
      %p100 = scmp.ne.s32.totalorder %s88, %s89
      %p101 = scmp.eq.s32.totalorder %s32, 1
      %p102 = por %p100, %p101
      %p104 = scmp.ne.s32.totalorder %s89, %s103
      %p105 = scmp.eq.s32.totalorder %s32, 0
      %p106 = por %p104, %p105
      %s108 = sadd.s32 %s107, 1
      %p111 = scmp.eq.s32.totalorder %s26, 1
      %p112 = scmp.ne.s32.totalorder %s107, %s109
      %p113 = scmp.eq.s32.totalorder %s26, 0
      %p114 = por %p112, %p113
      %p115 = scmp.ne.s32.totalorder %s107, %s109
      %p116 = scmp.eq.s32.totalorder %s31, 1
      %p117 = por %p115, %p116
      %p118 = scmp.ne.s32.totalorder %s109, %s110
      %p119 = scmp.eq.s32.totalorder %s31, 0
      %p120 = por %p118, %p119
      %p121 = scmp.ne.s32.totalorder %s109, %s110
      %p122 = scmp.eq.s32.totalorder %s32, 1
      %p123 = por %p121, %p122
      %p125 = scmp.ne.s32.totalorder %s110, %s124
      %p126 = scmp.eq.s32.totalorder %s32, 0
      %p127 = por %p125, %p126
      %s129 = sadd.s32 %s128, 1
      %p132 = scmp.eq.s32.totalorder %s26, 1
      %p133 = scmp.ne.s32.totalorder %s128, %s130
      %p134 = scmp.eq.s32.totalorder %s26, 0
      %p135 = por %p133, %p134
      %p136 = scmp.ne.s32.totalorder %s128, %s130
      %p137 = scmp.eq.s32.totalorder %s31, 1
      %p138 = por %p136, %p137
      %p139 = scmp.ne.s32.totalorder %s130, %s131
      %p140 = scmp.eq.s32.totalorder %s31, 0
      %p141 = por %p139, %p140
      %p142 = scmp.ne.s32.totalorder %s130, %s131
      %p143 = scmp.eq.s32.totalorder %s32, 1
      %p144 = por %p142, %p143
      %p146 = scmp.ne.s32.totalorder %s131, %s145
      %p147 = scmp.eq.s32.totalorder %s32, 0
      %p148 = por %p146, %p147
      %s150 = sadd.s32 %s149, 1
      %p153 = scmp.eq.s32.totalorder %s26, 1
      %p154 = scmp.ne.s32.totalorder %s149, %s151
      %p155 = scmp.eq.s32.totalorder %s26, 0
      %p156 = por %p154, %p155
      %p157 = scmp.ne.s32.totalorder %s149, %s151
      %p158 = scmp.eq.s32.totalorder %s31, 1
      %p159 = por %p157, %p158
      %p160 = scmp.ne.s32.totalorder %s151, %s152
      %p161 = scmp.eq.s32.totalorder %s31, 0
      %p162 = por %p160, %p161
      %p163 = scmp.ne.s32.totalorder %s151, %s152
      %p164 = scmp.eq.s32.totalorder %s32, 1
      %p165 = por %p163, %p164
      %p167 = scmp.ne.s32.totalorder %s152, %s166
      %p168 = scmp.eq.s32.totalorder %s32, 0
      %p169 = por %p167, %p168
      %s171 = sadd.s32 %s170, 1
      %p174 = scmp.eq.s32.totalorder %s26, 1
      %p175 = scmp.ne.s32.totalorder %s170, %s172
      %p176 = scmp.eq.s32.totalorder %s26, 0
      %p177 = por %p175, %p176
      %p178 = scmp.ne.s32.totalorder %s170, %s172
      %p179 = scmp.eq.s32.totalorder %s31, 1
      %p180 = por %p178, %p179
      %p181 = scmp.ne.s32.totalorder %s172, %s173
      %p182 = scmp.eq.s32.totalorder %s31, 0
      %p183 = por %p181, %p182
      %p184 = scmp.ne.s32.totalorder %s172, %s173
      %p185 = scmp.eq.s32.totalorder %s32, 1
      %p186 = por %p184, %p185
      %p188 = scmp.ne.s32.totalorder %s173, %s187
      %p189 = scmp.eq.s32.totalorder %s32, 0
      %p190 = por %p188, %p189
      %s192 = sadd.s32 %s191, 1
      %p195 = scmp.eq.s32.totalorder %s26, 1
      %p196 = scmp.ne.s32.totalorder %s191, %s193
      %p197 = scmp.eq.s32.totalorder %s26, 0
      %p198 = por %p196, %p197
      %p199 = scmp.ne.s32.totalorder %s191, %s193
      %p200 = scmp.eq.s32.totalorder %s31, 1
      %p201 = por %p199, %p200
      %p202 = scmp.ne.s32.totalorder %s193, %s194
      %p203 = scmp.eq.s32.totalorder %s31, 0
      %p204 = por %p202, %p203
      %p205 = scmp.ne.s32.totalorder %s193, %s194
      %p206 = scmp.eq.s32.totalorder %s32, 1
      %p207 = por %p205, %p206
      %p209 = scmp.ne.s32.totalorder %s194, %s208
      %p210 = scmp.eq.s32.totalorder %s32, 0
      %p211 = por %p209, %p210
      %s213 = sadd.s32 %s212, 1
      %p216 = scmp.eq.s32.totalorder %s26, 1
      %p217 = scmp.ne.s32.totalorder %s212, %s214
      %p218 = scmp.eq.s32.totalorder %s26, 0
      %p219 = por %p217, %p218
      %p220 = scmp.ne.s32.totalorder %s212, %s214
      %p221 = scmp.eq.s32.totalorder %s31, 1
      %p222 = por %p220, %p221
      %p223 = scmp.ne.s32.totalorder %s214, %s215
      %p224 = scmp.eq.s32.totalorder %s31, 0
      %p225 = por %p223, %p224
      %p226 = scmp.ne.s32.totalorder %s214, %s215
      %p227 = scmp.eq.s32.totalorder %s32, 1
      %p228 = por %p226, %p227
      %p230 = scmp.ne.s32.totalorder %s215, %s229
      %p231 = scmp.eq.s32.totalorder %s32, 0
      %p232 = por %p230, %p231
      %s234 = sadd.s32 %s233, 1
      %p237 = scmp.eq.s32.totalorder %s26, 1
      %p238 = scmp.ne.s32.totalorder %s233, %s235
      %p239 = scmp.eq.s32.totalorder %s26, 0
      %p240 = por %p238, %p239
      %p241 = scmp.ne.s32.totalorder %s233, %s235
      %p242 = scmp.eq.s32.totalorder %s31, 1
      %p243 = por %p241, %p242
      %p244 = scmp.ne.s32.totalorder %s235, %s236
      %p245 = scmp.eq.s32.totalorder %s31, 0
      %p246 = por %p244, %p245
      %p247 = scmp.ne.s32.totalorder %s235, %s236
      %p248 = scmp.eq.s32.totalorder %s32, 1
      %p249 = por %p247, %p248
      %p251 = scmp.ne.s32.totalorder %s236, %s250
      %p252 = scmp.eq.s32.totalorder %s32, 0
      %p253 = por %p251, %p252
      %s254 = ssub.s32 %s26, %s33
      %p255 = scmp.eq.s32.totalorder %s254, 0
      %s257 = sadd.s32 %s256, 1
      %s258 = scalar_select %p255, %s256, %s257
      %p261 = pneg %p255
      %p262 = scmp.eq.s32.totalorder %s26, 1
      %p263 = por %p261, %p262
      %p264 = scmp.ne.s32.totalorder %s256, %s259
      %p265 = scmp.eq.s32.totalorder %s26, 0
      %p266 = por %p264, %p265
      %p267 = scmp.ne.s32.totalorder %s256, %s259
      %p268 = scmp.eq.s32.totalorder %s31, 1
      %p269 = por %p267, %p268
      %p270 = scmp.ne.s32.totalorder %s259, %s260
      %p271 = scmp.eq.s32.totalorder %s31, 0
      %p272 = por %p270, %p271
      %p273 = scmp.ne.s32.totalorder %s259, %s260
      %p274 = scmp.eq.s32.totalorder %s32, 1
      %p275 = por %p273, %p274
      %p277 = scmp.ne.s32.totalorder %s260, %s276
      %p278 = scmp.eq.s32.totalorder %s32, 0
      %p279 = por %p277, %p278
      %p280 = scmp.le.s32.totalorder 1, %s26
      %p281 = scmp.lt.s32.totalorder %s26, 3
      %p282 = pnand %p280, %p281
      %p283 = pneg %p282
      // Predicated region
      $region9: #{dgcnn_forward.2} parent=5 // pred_check
        _
      $region10: #{dgcnn_forward.2} parent=5 // pred_check_branch
        %285 = sbr.rel (%p282) target = $region12
      $region11: #{dgcnn_forward.2} parent=5 // pred_region
        %s286 = ssub.s32 %s26, 1
        // Predicated region
        $region13: #{dgcnn_forward.2} parent=11 // pred_check
          %p287 = pneg %p99
        $region14: #{dgcnn_forward.2} parent=11 // pred_check_branch
          %289 = sbr.rel (%p287) target = $region16
        $region15: #{dgcnn_forward.2} parent=11 // pred_region
          %291 = vsyncadd [#allocation5], 0
          %s292 = sshll.u32 %s2, 4
          %s293 = int_to_ptr.hbm [resolvable:$true] %s292
          %s294 = sshll.u32 [#allocation6], 4
          %s295 = int_to_ptr.vmem [resolvable:$true] %s294
          %300 = dma.hbm_to_vmem [thread:$0]  %s293, 1024, %s295, [#allocation5], 64, 64, 4
        $region16: #{dgcnn_forward.2} parent=11 // pred_fallthru
          _
        // Predicated region
        $region17: #{dgcnn_forward.2} parent=11 // pred_check
          %p301 = pneg %p120
        $region18: #{dgcnn_forward.2} parent=11 // pred_check_branch
          %303 = sbr.rel (%p301) target = $region20
        $region19: #{dgcnn_forward.2} parent=11 // pred_region
          %305 = vsyncadd [#allocation8], 0
          %s307 = sshll.u32 %s3, 4
          %s308 = int_to_ptr.hbm [resolvable:$true] %s307
          %s309 = sshll.u32 [#allocation7], 4
          %s310 = int_to_ptr.vmem [resolvable:$true] %s309
          %312 = dma.hbm_to_vmem [thread:$0]  %s308, 16, %s310, [#allocation8]
        $region20: #{dgcnn_forward.2} parent=11 // pred_fallthru
          _
        // Predicated region
        $region21: #{dgcnn_forward.2} parent=11 // pred_check
          %p313 = pneg %p141
        $region22: #{dgcnn_forward.2} parent=11 // pred_check_branch
          %315 = sbr.rel (%p313) target = $region24
        $region23: #{dgcnn_forward.2} parent=11 // pred_region
          %317 = vsyncadd [#allocation8], 0
          %s318 = sshll.u32 %s4, 4
          %s319 = int_to_ptr.hbm [resolvable:$true] %s318
          %s320 = sshll.u32 [#allocation9], 4
          %s321 = int_to_ptr.vmem [resolvable:$true] %s320
          %326 = dma.hbm_to_vmem [thread:$0]  %s319, 1024, %s321, [#allocation8], 64, 64, 4
        $region24: #{dgcnn_forward.2} parent=11 // pred_fallthru
          _
        // Predicated region
        $region25: #{dgcnn_forward.2} parent=11 // pred_check
          %p327 = pneg %p162
        $region26: #{dgcnn_forward.2} parent=11 // pred_check_branch
          %329 = sbr.rel (%p327) target = $region28
        $region27: #{dgcnn_forward.2} parent=11 // pred_region
          %331 = vsyncadd [#allocation11], 0
          %s333 = sshll.u32 %s5, 4
          %s334 = int_to_ptr.hbm [resolvable:$true] %s333
          %s335 = sshll.u32 [#allocation10], 4
          %s336 = int_to_ptr.vmem [resolvable:$true] %s335
          %338 = dma.hbm_to_vmem [thread:$0]  %s334, 16, %s336, [#allocation11]
        $region28: #{dgcnn_forward.2} parent=11 // pred_fallthru
          _
        // Predicated region
        $region29: #{dgcnn_forward.2} parent=11 // pred_check
          %p339 = pneg %p183
        $region30: #{dgcnn_forward.2} parent=11 // pred_check_branch
          %341 = sbr.rel (%p339) target = $region32
        $region31: #{dgcnn_forward.2} parent=11 // pred_region
          %343 = vsyncadd [#allocation11], 0
          %s344 = sshll.u32 %s6, 4
          %s345 = int_to_ptr.hbm [resolvable:$true] %s344
          %s346 = sshll.u32 [#allocation12], 4
          %s347 = int_to_ptr.vmem [resolvable:$true] %s346
          %352 = dma.hbm_to_vmem [thread:$0]  %s345, 1024, %s347, [#allocation11], 64, 64, 4
        $region32: #{dgcnn_forward.2} parent=11 // pred_fallthru
          _
        // Predicated region
        $region33: #{dgcnn_forward.2} parent=11 // pred_check
          %p353 = pneg %p204
        $region34: #{dgcnn_forward.2} parent=11 // pred_check_branch
          %355 = sbr.rel (%p353) target = $region36
        $region35: #{dgcnn_forward.2} parent=11 // pred_region
          %357 = vsyncadd [#allocation14], 0
          %s359 = sshll.u32 %s7, 4
          %s360 = int_to_ptr.hbm [resolvable:$true] %s359
          %s361 = sshll.u32 [#allocation13], 4
          %s362 = int_to_ptr.vmem [resolvable:$true] %s361
          %364 = dma.hbm_to_vmem [thread:$0]  %s360, 16, %s362, [#allocation14]
        $region36: #{dgcnn_forward.2} parent=11 // pred_fallthru
          _
        // Predicated region
        $region37: #{dgcnn_forward.2} parent=11 // pred_check
          %p365 = pneg %p225
        $region38: #{dgcnn_forward.2} parent=11 // pred_check_branch
          %367 = sbr.rel (%p365) target = $region40
        $region39: #{dgcnn_forward.2} parent=11 // pred_region
          %369 = vsyncadd [#allocation14], 0
          %s370 = sshll.u32 %s8, 4
          %s371 = int_to_ptr.hbm [resolvable:$true] %s370
          %s372 = sshll.u32 [#allocation15], 4
          %s373 = int_to_ptr.vmem [resolvable:$true] %s372
          %378 = dma.hbm_to_vmem [thread:$0]  %s371, 1024, %s373, [#allocation14], 64, 64, 4
        $region40: #{dgcnn_forward.2} parent=11 // pred_fallthru
          _
        // Predicated region
        $region41: #{dgcnn_forward.2} parent=11 // pred_check
          %p379 = pneg %p246
        $region42: #{dgcnn_forward.2} parent=11 // pred_check_branch
          %381 = sbr.rel (%p379) target = $region44
        $region43: #{dgcnn_forward.2} parent=11 // pred_region
          %383 = vsyncadd [#allocation17], 0
          %s385 = sshll.u32 %s9, 4
          %s386 = int_to_ptr.hbm [resolvable:$true] %s385
          %s387 = sshll.u32 [#allocation16], 4
          %s388 = int_to_ptr.vmem [resolvable:$true] %s387
          %390 = dma.hbm_to_vmem [thread:$0]  %s386, 16, %s388, [#allocation17]
        $region44: #{dgcnn_forward.2} parent=11 // pred_fallthru
          _
      $region12: #{dgcnn_forward.2} parent=5 // pred_fallthru
        _
      %p391 = scmp.lt.s32.totalorder %s26, 2
      // Predicated region
      $region45: #{dgcnn_forward.2} parent=5 // pred_check
        %p392 = pneg %p391
      $region46: #{dgcnn_forward.2} parent=5 // pred_check_branch
        %394 = sbr.rel (%p392) target = $region48
      $region47: #{dgcnn_forward.2} parent=5 // pred_region
        // Predicated region
        $region49: #{dgcnn_forward.2} parent=47 // pred_check
          %p395 = pneg %p46
        $region50: #{dgcnn_forward.2} parent=47 // pred_check_branch
          %397 = sbr.rel (%p395) target = $region52
        $region51: #{dgcnn_forward.2} parent=47 // pred_region
          %s398 = sand.u32 %s36, 1
          %s399 = scalar_lea.sflag [#allocation3], %s398
          %s400 = sand.u32 %s36, 1
          %s401 = smul.addr %s400, 8
          %s402 = scalar_lea.vmem [#allocation2], %s401
          %404 = vsyncadd %s399, 0
          %s405 = smul.addr %s26, 2
          %s406 = smul.addr %s405, 4
          %s407 = scalar_lea.hbm %s0, %s406
          %s408 = sshll.u32 %s407, 4
          %s409 = int_to_ptr.hbm [resolvable:$true] %s408
          %s410 = sshll.u32 %s402, 4
          %s411 = int_to_ptr.vmem [resolvable:$true] %s410
          %416 = dma.hbm_to_vmem [thread:$0]  %s409, 128, %s411, %s399, 64, 64, 4
        $region52: #{dgcnn_forward.2} parent=47 // pred_fallthru
          _
        // Predicated region
        $region53: #{dgcnn_forward.2} parent=47 // pred_check
          %p417 = pneg %p72
        $region54: #{dgcnn_forward.2} parent=47 // pred_check_branch
          %419 = sbr.rel (%p417) target = $region56
        $region55: #{dgcnn_forward.2} parent=47 // pred_region
          %s420 = sand.u32 %s26, 1
          %s421 = scalar_lea.sflag [#allocation5], %s420
          %s422 = sand.u32 %s62, 1
          %s423 = smul.addr %s422, 16
          %s424 = scalar_lea.vmem [#allocation4], %s423
          %426 = vsyncadd %s421, 0
          %s427 = smul.addr %s26, 2
          %s428 = smul.addr %s427, 8
          %s429 = scalar_lea.hbm %s1, %s428
          %s430 = sshll.u32 %s429, 4
          %s431 = int_to_ptr.hbm [resolvable:$true] %s430
          %s432 = sshll.u32 %s424, 4
          %s433 = int_to_ptr.vmem [resolvable:$true] %s432
          %438 = dma.hbm_to_vmem [thread:$0]  %s431, 256, %s433, %s421, 128, 128, 8
        $region56: #{dgcnn_forward.2} parent=47 // pred_fallthru
          _
      $region48: #{dgcnn_forward.2} parent=5 // pred_fallthru
        _
      %p439 = scmp.le.s32.totalorder 1, %s26
      %p440 = scmp.lt.s32.totalorder %s26, 3
      %p441 = pnand %p439, %p440
      %p442 = pneg %p441
      // Predicated region
      $region57: #{dgcnn_forward.2} parent=5 // pred_check
        _
      $region58: #{dgcnn_forward.2} parent=5 // pred_check_branch
        %444 = sbr.rel (%p441) target = $region60
      $region59: #{dgcnn_forward.2} parent=5 // pred_region
        %s445 = ssub.s32 %s26, 1
        %s446 = sand.u32 %s39, 1
        %s447 = scalar_lea.sflag [#allocation3], %s446
        %s448 = sand.u32 %s39, 1
        %s449 = smul.addr %s448, 8
        %s450 = scalar_lea.vmem [#allocation2], %s449
        // Predicated region
        $region61: #{dgcnn_forward.2} parent=59 // pred_check
          %p451 = pneg %p52
        $region62: #{dgcnn_forward.2} parent=59 // pred_check_branch
          %453 = sbr.rel (%p451) target = $region64
        $region63: #{dgcnn_forward.2} parent=59 // pred_region
          %455 = dma.done %s447, 128
        $region64: #{dgcnn_forward.2} parent=59 // pred_fallthru
          _
        %s456 = sand.u32 %s31, 1
        %s457 = scalar_lea.sflag [#allocation5], %s456
        %s458 = sand.u32 %s65, 1
        %s459 = smul.addr %s458, 16
        %s460 = scalar_lea.vmem [#allocation4], %s459
        // Predicated region
        $region65: #{dgcnn_forward.2} parent=59 // pred_check
          %p461 = pneg %p78
        $region66: #{dgcnn_forward.2} parent=59 // pred_check_branch
          %463 = sbr.rel (%p461) target = $region68
        $region67: #{dgcnn_forward.2} parent=59 // pred_region
          %465 = dma.done %s457, 256
        $region68: #{dgcnn_forward.2} parent=59 // pred_fallthru
          _
        // Predicated region
        $region69: #{dgcnn_forward.2} parent=59 // pred_check
          %p466 = pneg %p99
        $region70: #{dgcnn_forward.2} parent=59 // pred_check_branch
          %468 = sbr.rel (%p466) target = $region72
        $region71: #{dgcnn_forward.2} parent=59 // pred_region
          %470 = dma.done [#allocation5], 1024
        $region72: #{dgcnn_forward.2} parent=59 // pred_fallthru
          _
        // Predicated region
        $region73: #{dgcnn_forward.2} parent=59 // pred_check
          %p471 = pneg %p120
        $region74: #{dgcnn_forward.2} parent=59 // pred_check_branch
          %473 = sbr.rel (%p471) target = $region76
        $region75: #{dgcnn_forward.2} parent=59 // pred_region
          %475 = dma.done [#allocation8], 16
        $region76: #{dgcnn_forward.2} parent=59 // pred_fallthru
          _
        // Predicated region
        $region77: #{dgcnn_forward.2} parent=59 // pred_check
          %p476 = pneg %p141
        $region78: #{dgcnn_forward.2} parent=59 // pred_check_branch
          %478 = sbr.rel (%p476) target = $region80
        $region79: #{dgcnn_forward.2} parent=59 // pred_region
          %480 = dma.done [#allocation8], 1024
        $region80: #{dgcnn_forward.2} parent=59 // pred_fallthru
          _
        // Predicated region
        $region81: #{dgcnn_forward.2} parent=59 // pred_check
          %p481 = pneg %p162
        $region82: #{dgcnn_forward.2} parent=59 // pred_check_branch
          %483 = sbr.rel (%p481) target = $region84
        $region83: #{dgcnn_forward.2} parent=59 // pred_region
          %485 = dma.done [#allocation11], 16
        $region84: #{dgcnn_forward.2} parent=59 // pred_fallthru
          _
        // Predicated region
        $region85: #{dgcnn_forward.2} parent=59 // pred_check
          %p486 = pneg %p183
        $region86: #{dgcnn_forward.2} parent=59 // pred_check_branch
          %488 = sbr.rel (%p486) target = $region88
        $region87: #{dgcnn_forward.2} parent=59 // pred_region
          %490 = dma.done [#allocation11], 1024
        $region88: #{dgcnn_forward.2} parent=59 // pred_fallthru
          _
        // Predicated region
        $region89: #{dgcnn_forward.2} parent=59 // pred_check
          %p491 = pneg %p204
        $region90: #{dgcnn_forward.2} parent=59 // pred_check_branch
          %493 = sbr.rel (%p491) target = $region92
        $region91: #{dgcnn_forward.2} parent=59 // pred_region
          %495 = dma.done [#allocation14], 16
        $region92: #{dgcnn_forward.2} parent=59 // pred_fallthru
          _
        // Predicated region
        $region93: #{dgcnn_forward.2} parent=59 // pred_check
          %p496 = pneg %p225
        $region94: #{dgcnn_forward.2} parent=59 // pred_check_branch
          %498 = sbr.rel (%p496) target = $region96
        $region95: #{dgcnn_forward.2} parent=59 // pred_region
          %500 = dma.done [#allocation14], 1024
        $region96: #{dgcnn_forward.2} parent=59 // pred_fallthru
          _
        // Predicated region
        $region97: #{dgcnn_forward.2} parent=59 // pred_check
          %p501 = pneg %p246
        $region98: #{dgcnn_forward.2} parent=59 // pred_check_branch
          %503 = sbr.rel (%p501) target = $region100
        $region99: #{dgcnn_forward.2} parent=59 // pred_region
          %505 = dma.done [#allocation17], 16
        $region100: #{dgcnn_forward.2} parent=59 // pred_fallthru
          _
        %s506 = sand.u32 %s39, 1
        %s507 = scalar_lea.sflag [#allocation3], %s506
        %s508 = sand.u32 %s39, 1
        %s509 = smul.addr %s508, 8
        %s510 = scalar_lea.vmem [#allocation2], %s509
        %p511 = pneg %p52
        %p512 = pneg %p49
        %s513 = sand.u32 %s31, 1
        %s514 = scalar_lea.sflag [#allocation5], %s513
        %s515 = sand.u32 %s65, 1
        %s516 = smul.addr %s515, 16
        %s517 = scalar_lea.vmem [#allocation4], %s516
        %p518 = pneg %p78
        %p519 = pneg %p75
        %p520 = pneg %p99
        %p521 = pneg %p96
        %p522 = pneg %p120
        %p523 = pneg %p117
        %p524 = pneg %p141
        %p525 = pneg %p138
        %p526 = pneg %p162
        %p527 = pneg %p159
        %p528 = pneg %p183
        %p529 = pneg %p180
        %p530 = pneg %p204
        %p531 = pneg %p201
        %p532 = pneg %p225
        %p533 = pneg %p222
        %p534 = pneg %p246
        %p535 = pneg %p243
        %p536 = pneg %p272
        %p537 = pneg %p269
        %p538 = scmp.lt.s32.totalorder %s31, 1
        %s539 = scalar_select %p538, %s31, 1
        %s540 = smul.addr %s539, 2
        %s541 = smul.addr %s540, 8
        %s542 = scalar_lea.vmem %s10, %s541
        %p543 = scmp.lt.s32.totalorder %s31, 1
        %s544 = scalar_select %p543, %s31, 1
        %s545 = smul.addr %s544, 2
        %s546 = smul.addr %s545, 8
        %s547 = scalar_lea.vmem %s10, %s546
        %v549 = vld [vmem:[%s450] sm:$0xf]
        %v550 = vld [vmem:[%s450 + $0x4] sm:$0xf]
        %v551 = vld [vmem:[%s460] sm:$0xff]
        %v552 = vld [vmem:[%s460 + $0x8] sm:$0xff]
        %v553 = vpack.c.bf16 %v552, %v551
        %v554 = vld [vmem:[#allocation6] sm:$0xf]
        %v555 = vld [vmem:[#allocation6 + $0x4] sm:$0xf]
        %v556 = vld [vmem:[#allocation6 + $0x8] sm:$0xf]
        %v557 = vld [vmem:[#allocation6 + $0xc] sm:$0xf]
        %v558 = vld [vmem:[#allocation6 + $0x10] sm:$0xf]
        %v559 = vld [vmem:[#allocation6 + $0x14] sm:$0xf]
        %v560 = vld [vmem:[#allocation6 + $0x18] sm:$0xf]
        %v561 = vld [vmem:[#allocation6 + $0x1c] sm:$0xf]
        %v562 = vld [vmem:[#allocation6 + $0x20] sm:$0xf]
        %v563 = vld [vmem:[#allocation6 + $0x24] sm:$0xf]
        %v564 = vld [vmem:[#allocation6 + $0x28] sm:$0xf]
        %v565 = vld [vmem:[#allocation6 + $0x2c] sm:$0xf]
        %v566 = vld [vmem:[#allocation6 + $0x30] sm:$0xf]
        %v567 = vld [vmem:[#allocation6 + $0x34] sm:$0xf]
        %v568 = vld [vmem:[#allocation6 + $0x38] sm:$0xf]
        %v569 = vld [vmem:[#allocation6 + $0x3c] sm:$0xf]
        %v586 = vunpack.c.l.b16 %v554
        %v587 = vunpack.c.l.b16 %v555
        %v588 = vunpack.c.l.b16 %v556
        %v589 = vunpack.c.l.b16 %v557
        %v590 = vunpack.c.l.b16 %v558
        %v591 = vunpack.c.l.b16 %v559
        %v592 = vunpack.c.l.b16 %v560
        %v593 = vunpack.c.l.b16 %v561
        %v594 = vunpack.c.l.b16 %v562
        %v595 = vunpack.c.l.b16 %v563
        %v596 = vunpack.c.l.b16 %v564
        %v597 = vunpack.c.l.b16 %v565
        %v598 = vunpack.c.l.b16 %v566
        %v599 = vunpack.c.l.b16 %v567
        %v600 = vunpack.c.l.b16 %v568
        %v601 = vunpack.c.l.b16 %v569
        %v602 = vpack.c.b16 %v587, %v586
        %v603 = vpack.c.b16 %v589, %v588
        %v604 = vpack.c.b16 %v591, %v590
        %v605 = vpack.c.b16 %v593, %v592
        %v606 = vpack.c.b16 %v595, %v594
        %v607 = vpack.c.b16 %v597, %v596
        %v608 = vpack.c.b16 %v599, %v598
        %v609 = vpack.c.b16 %v601, %v600
        %618 = vmatpush.bf16.msra.mxu0 %v609
        %619 = vmatpush.bf16.msra.mxu0 %v608
        %620 = vmatpush.bf16.msra.mxu0 %v607
        %621 = vmatpush.bf16.msra.mxu0 %v606
        %622 = vmatpush.bf16.msra.mxu0 %v605
        %623 = vmatpush.bf16.msra.mxu0 %v604
        %624 = vmatpush.bf16.msra.mxu0 %v603
        %625 = vmatpush.bf16.msra.mxu0 %v602
        %626 = vmatmul.bf16.gmra.mxu0 %v553
        %v627 = vpop.f32.mrf.mxu0
        %v628 = vadd.f32 0.0, %v627
        %v629 = vpop.f32.mrf.mxu0
        %v630 = vadd.f32 0.0, %v629
        %631 = vdwg.mxu0
        %v632 = vpack.c.bf16 %v630, %v628
        %v633 = vld [vmem:[#allocation7] sm:$0x1]
        %v635 = vperm.slane %v633, 0
        %v639 = vunpack.c.l.b16 %v549
        %v640 = vunpack.c.l.b16 %v550
        %v641 = vpack.c.b16 %v640, %v639
        %vm642 = vcmask 130048
        %v644 = vsel %vm642, %v641, 0
        %646 = vmatpush.bf16.msra.mxu0 0
        %647 = vmatpush.bf16.msra.mxu0 0
        %648 = vmatpush.bf16.msra.mxu0 0
        %649 = vmatpush.bf16.msra.mxu0 0
        %650 = vmatpush.bf16.msra.mxu0 0
        %651 = vmatpush.bf16.msra.mxu0 0
        %652 = vmatpush.bf16.msra.mxu0 0
        %653 = vmatpush.bf16.msra.mxu0 %v632
        %654 = vmatmul.bf16.gmra.mxu0 %v644
        %v655 = vpop.f32.mrf.mxu0
        %v656 = vadd.f32 %v635, %v655
        %v657 = vpop.f32.mrf.mxu0
        %v658 = vadd.f32 %v635, %v657
        %659 = vdwg.mxu0
        %v660 = vtanh.pop %v656
        %v661 = vtanh.pop %v658
        %v662 = vpack.c.bf16 %v661, %v660
        %v663 = vld [vmem:[#allocation9] sm:$0xf]
        %v664 = vld [vmem:[#allocation9 + $0x4] sm:$0xf]
        %v665 = vld [vmem:[#allocation9 + $0x8] sm:$0xf]
        %v666 = vld [vmem:[#allocation9 + $0xc] sm:$0xf]
        %v667 = vld [vmem:[#allocation9 + $0x10] sm:$0xf]
        %v668 = vld [vmem:[#allocation9 + $0x14] sm:$0xf]
        %v669 = vld [vmem:[#allocation9 + $0x18] sm:$0xf]
        %v670 = vld [vmem:[#allocation9 + $0x1c] sm:$0xf]
        %v671 = vld [vmem:[#allocation9 + $0x20] sm:$0xf]
        %v672 = vld [vmem:[#allocation9 + $0x24] sm:$0xf]
        %v673 = vld [vmem:[#allocation9 + $0x28] sm:$0xf]
        %v674 = vld [vmem:[#allocation9 + $0x2c] sm:$0xf]
        %v675 = vld [vmem:[#allocation9 + $0x30] sm:$0xf]
        %v676 = vld [vmem:[#allocation9 + $0x34] sm:$0xf]
        %v677 = vld [vmem:[#allocation9 + $0x38] sm:$0xf]
        %v678 = vld [vmem:[#allocation9 + $0x3c] sm:$0xf]
        %v695 = vunpack.c.l.b16 %v663
        %v696 = vunpack.c.l.b16 %v664
        %v697 = vunpack.c.l.b16 %v665
        %v698 = vunpack.c.l.b16 %v666
        %v699 = vunpack.c.l.b16 %v667
        %v700 = vunpack.c.l.b16 %v668
        %v701 = vunpack.c.l.b16 %v669
        %v702 = vunpack.c.l.b16 %v670
        %v703 = vunpack.c.l.b16 %v671
        %v704 = vunpack.c.l.b16 %v672
        %v705 = vunpack.c.l.b16 %v673
        %v706 = vunpack.c.l.b16 %v674
        %v707 = vunpack.c.l.b16 %v675
        %v708 = vunpack.c.l.b16 %v676
        %v709 = vunpack.c.l.b16 %v677
        %v710 = vunpack.c.l.b16 %v678
        %v711 = vpack.c.b16 %v696, %v695
        %v712 = vpack.c.b16 %v698, %v697
        %v713 = vpack.c.b16 %v700, %v699
        %v714 = vpack.c.b16 %v702, %v701
        %v715 = vpack.c.b16 %v704, %v703
        %v716 = vpack.c.b16 %v706, %v705
        %v717 = vpack.c.b16 %v708, %v707
        %v718 = vpack.c.b16 %v710, %v709
        %727 = vmatpush.bf16.msra.mxu0 %v718
        %728 = vmatpush.bf16.msra.mxu0 %v717
        %729 = vmatpush.bf16.msra.mxu0 %v716
        %730 = vmatpush.bf16.msra.mxu0 %v715
        %731 = vmatpush.bf16.msra.mxu0 %v714
        %732 = vmatpush.bf16.msra.mxu0 %v713
        %733 = vmatpush.bf16.msra.mxu0 %v712
        %734 = vmatpush.bf16.msra.mxu0 %v711
        %735 = vmatmul.bf16.gmra.mxu0 %v662
        %v736 = vpop.f32.mrf.mxu0
        %v737 = vadd.f32 0.0, %v736
        %v738 = vpop.f32.mrf.mxu0
        %v739 = vadd.f32 0.0, %v738
        %740 = vdwg.mxu0
        %v741 = vpack.c.bf16 %v739, %v737
        %v742 = vld [vmem:[#allocation10] sm:$0x1]
        %v744 = vperm.slane %v742, 0
        %746 = vmatpush.bf16.msra.mxu0 0
        %747 = vmatpush.bf16.msra.mxu0 0
        %748 = vmatpush.bf16.msra.mxu0 0
        %749 = vmatpush.bf16.msra.mxu0 0
        %750 = vmatpush.bf16.msra.mxu0 0
        %751 = vmatpush.bf16.msra.mxu0 0
        %752 = vmatpush.bf16.msra.mxu0 0
        %753 = vmatpush.bf16.msra.mxu0 %v741
        %754 = vmatmul.bf16.gmra.mxu0 %v644
        %v755 = vpop.f32.mrf.mxu0
        %v756 = vadd.f32 %v744, %v755
        %v757 = vpop.f32.mrf.mxu0
        %v758 = vadd.f32 %v744, %v757
        %759 = vdwg.mxu0
        %v760 = vtanh.pop %v756
        %v761 = vtanh.pop %v758
        %v762 = vpack.c.bf16 %v761, %v760
        %v763 = vld [vmem:[#allocation12] sm:$0xf]
        %v764 = vld [vmem:[#allocation12 + $0x4] sm:$0xf]
        %v765 = vld [vmem:[#allocation12 + $0x8] sm:$0xf]
        %v766 = vld [vmem:[#allocation12 + $0xc] sm:$0xf]
        %v767 = vld [vmem:[#allocation12 + $0x10] sm:$0xf]
        %v768 = vld [vmem:[#allocation12 + $0x14] sm:$0xf]
        %v769 = vld [vmem:[#allocation12 + $0x18] sm:$0xf]
        %v770 = vld [vmem:[#allocation12 + $0x1c] sm:$0xf]
        %v771 = vld [vmem:[#allocation12 + $0x20] sm:$0xf]
        %v772 = vld [vmem:[#allocation12 + $0x24] sm:$0xf]
        %v773 = vld [vmem:[#allocation12 + $0x28] sm:$0xf]
        %v774 = vld [vmem:[#allocation12 + $0x2c] sm:$0xf]
        %v775 = vld [vmem:[#allocation12 + $0x30] sm:$0xf]
        %v776 = vld [vmem:[#allocation12 + $0x34] sm:$0xf]
        %v777 = vld [vmem:[#allocation12 + $0x38] sm:$0xf]
        %v778 = vld [vmem:[#allocation12 + $0x3c] sm:$0xf]
        %v795 = vunpack.c.l.b16 %v763
        %v796 = vunpack.c.l.b16 %v764
        %v797 = vunpack.c.l.b16 %v765
        %v798 = vunpack.c.l.b16 %v766
        %v799 = vunpack.c.l.b16 %v767
        %v800 = vunpack.c.l.b16 %v768
        %v801 = vunpack.c.l.b16 %v769
        %v802 = vunpack.c.l.b16 %v770
        %v803 = vunpack.c.l.b16 %v771
        %v804 = vunpack.c.l.b16 %v772
        %v805 = vunpack.c.l.b16 %v773
        %v806 = vunpack.c.l.b16 %v774
        %v807 = vunpack.c.l.b16 %v775
        %v808 = vunpack.c.l.b16 %v776
        %v809 = vunpack.c.l.b16 %v777
        %v810 = vunpack.c.l.b16 %v778
        %v811 = vpack.c.b16 %v796, %v795
        %v812 = vpack.c.b16 %v798, %v797
        %v813 = vpack.c.b16 %v800, %v799
        %v814 = vpack.c.b16 %v802, %v801
        %v815 = vpack.c.b16 %v804, %v803
        %v816 = vpack.c.b16 %v806, %v805
        %v817 = vpack.c.b16 %v808, %v807
        %v818 = vpack.c.b16 %v810, %v809
        %827 = vmatpush.bf16.msra.mxu0 %v818
        %828 = vmatpush.bf16.msra.mxu0 %v817
        %829 = vmatpush.bf16.msra.mxu0 %v816
        %830 = vmatpush.bf16.msra.mxu0 %v815
        %831 = vmatpush.bf16.msra.mxu0 %v814
        %832 = vmatpush.bf16.msra.mxu0 %v813
        %833 = vmatpush.bf16.msra.mxu0 %v812
        %834 = vmatpush.bf16.msra.mxu0 %v811
        %835 = vmatmul.bf16.gmra.mxu0 %v762
        %v836 = vpop.f32.mrf.mxu0
        %v837 = vadd.f32 0.0, %v836
        %v838 = vpop.f32.mrf.mxu0
        %v839 = vadd.f32 0.0, %v838
        %840 = vdwg.mxu0
        %v841 = vpack.c.bf16 %v839, %v837
        %v842 = vld [vmem:[#allocation13] sm:$0x1]
        %v844 = vperm.slane %v842, 0
        %846 = vmatpush.bf16.msra.mxu0 0
        %847 = vmatpush.bf16.msra.mxu0 0
        %848 = vmatpush.bf16.msra.mxu0 0
        %849 = vmatpush.bf16.msra.mxu0 0
        %850 = vmatpush.bf16.msra.mxu0 0
        %851 = vmatpush.bf16.msra.mxu0 0
        %852 = vmatpush.bf16.msra.mxu0 0
        %853 = vmatpush.bf16.msra.mxu0 %v841
        %854 = vmatmul.bf16.gmra.mxu0 %v644
        %v855 = vpop.f32.mrf.mxu0
        %v856 = vadd.f32 %v844, %v855
        %v857 = vpop.f32.mrf.mxu0
        %v858 = vadd.f32 %v844, %v857
        %859 = vdwg.mxu0
        %v860 = vtanh.pop %v856
        %v861 = vtanh.pop %v858
        %v862 = vpack.c.bf16 %v861, %v860
        %v863 = vld [vmem:[#allocation15] sm:$0xf]
        %v864 = vld [vmem:[#allocation15 + $0x4] sm:$0xf]
        %v865 = vld [vmem:[#allocation15 + $0x8] sm:$0xf]
        %v866 = vld [vmem:[#allocation15 + $0xc] sm:$0xf]
        %v867 = vld [vmem:[#allocation15 + $0x10] sm:$0xf]
        %v868 = vld [vmem:[#allocation15 + $0x14] sm:$0xf]
        %v869 = vld [vmem:[#allocation15 + $0x18] sm:$0xf]
        %v870 = vld [vmem:[#allocation15 + $0x1c] sm:$0xf]
        %v871 = vld [vmem:[#allocation15 + $0x20] sm:$0xf]
        %v872 = vld [vmem:[#allocation15 + $0x24] sm:$0xf]
        %v873 = vld [vmem:[#allocation15 + $0x28] sm:$0xf]
        %v874 = vld [vmem:[#allocation15 + $0x2c] sm:$0xf]
        %v875 = vld [vmem:[#allocation15 + $0x30] sm:$0xf]
        %v876 = vld [vmem:[#allocation15 + $0x34] sm:$0xf]
        %v877 = vld [vmem:[#allocation15 + $0x38] sm:$0xf]
        %v878 = vld [vmem:[#allocation15 + $0x3c] sm:$0xf]
        %v895 = vunpack.c.l.b16 %v863
        %v896 = vunpack.c.l.b16 %v864
        %v897 = vunpack.c.l.b16 %v865
        %v898 = vunpack.c.l.b16 %v866
        %v899 = vunpack.c.l.b16 %v867
        %v900 = vunpack.c.l.b16 %v868
        %v901 = vunpack.c.l.b16 %v869
        %v902 = vunpack.c.l.b16 %v870
        %v903 = vunpack.c.l.b16 %v871
        %v904 = vunpack.c.l.b16 %v872
        %v905 = vunpack.c.l.b16 %v873
        %v906 = vunpack.c.l.b16 %v874
        %v907 = vunpack.c.l.b16 %v875
        %v908 = vunpack.c.l.b16 %v876
        %v909 = vunpack.c.l.b16 %v877
        %v910 = vunpack.c.l.b16 %v878
        %v911 = vpack.c.b16 %v896, %v895
        %v912 = vpack.c.b16 %v898, %v897
        %v913 = vpack.c.b16 %v900, %v899
        %v914 = vpack.c.b16 %v902, %v901
        %v915 = vpack.c.b16 %v904, %v903
        %v916 = vpack.c.b16 %v906, %v905
        %v917 = vpack.c.b16 %v908, %v907
        %v918 = vpack.c.b16 %v910, %v909
        %927 = vmatpush.bf16.msra.mxu0 %v918
        %928 = vmatpush.bf16.msra.mxu0 %v917
        %929 = vmatpush.bf16.msra.mxu0 %v916
        %930 = vmatpush.bf16.msra.mxu0 %v915
        %931 = vmatpush.bf16.msra.mxu0 %v914
        %932 = vmatpush.bf16.msra.mxu0 %v913
        %933 = vmatpush.bf16.msra.mxu0 %v912
        %934 = vmatpush.bf16.msra.mxu0 %v911
        %935 = vmatmul.bf16.gmra.mxu0 %v862
        %v936 = vpop.f32.mrf.mxu0
        %v937 = vadd.f32 0.0, %v936
        %v938 = vpop.f32.mrf.mxu0
        %v939 = vadd.f32 0.0, %v938
        %940 = vdwg.mxu0
        %v941 = vpack.c.bf16 %v939, %v937
        %v942 = vld [vmem:[#allocation16] sm:$0x1]
        %v944 = vperm.slane %v942, 0
        %946 = vmatpush.bf16.msra.mxu0 0
        %947 = vmatpush.bf16.msra.mxu0 0
        %948 = vmatpush.bf16.msra.mxu0 0
        %949 = vmatpush.bf16.msra.mxu0 0
        %950 = vmatpush.bf16.msra.mxu0 0
        %951 = vmatpush.bf16.msra.mxu0 0
        %952 = vmatpush.bf16.msra.mxu0 0
        %953 = vmatpush.bf16.msra.mxu0 %v941
        %954 = vmatmul.bf16.gmra.mxu0 %v644
        %v955 = vpop.f32.mrf.mxu0
        %v956 = vadd.f32 %v944, %v955
        %v957 = vpop.f32.mrf.mxu0
        %v958 = vadd.f32 %v944, %v957
        %959 = vdwg.mxu0
        %v960 = vadd.f32 %v551, %v660
        %v961 = vadd.f32 %v552, %v661
        %v962 = vadd.f32 %v960, %v760
        %v963 = vadd.f32 %v961, %v761
        %v964 = vadd.f32 %v962, %v860
        %v965 = vadd.f32 %v963, %v861
        %v966 = vadd.f32 %v964, %v956
        %v967 = vadd.f32 %v965, %v958
        %968 = vst [vmem:[%s547] sm:$0xff] %v966
        %969 = vst [vmem:[%s547 + $0x8] sm:$0xff] %v967
        %p970 = scmp.lt.s32.totalorder %s31, 1
        %s971 = scalar_select %p970, %s31, 1
        %s972 = smul.addr %s971, 2
        %s973 = smul.addr %s972, 8
        %s974 = scalar_lea.vmem %s10, %s973
        // Predicated region
        $region101: #{dgcnn_forward.2} parent=59 // pred_check
          %p975 = pneg %p269
        $region102: #{dgcnn_forward.2} parent=59 // pred_check_branch
          %977 = sbr.rel (%p975) target = $region104
        $region103: #{dgcnn_forward.2} parent=59 // pred_region
          _
        $region104: #{dgcnn_forward.2} parent=59 // pred_fallthru
          _
      $region60: #{dgcnn_forward.2} parent=5 // pred_fallthru
        _
      %p978 = scmp.le.s32.totalorder 2, %s26
      // Predicated region
      $region105: #{dgcnn_forward.2} parent=5 // pred_check
        %p979 = pneg %p978
      $region106: #{dgcnn_forward.2} parent=5 // pred_check_branch
        %981 = sbr.rel (%p979) target = $region108
      $region107: #{dgcnn_forward.2} parent=5 // pred_region
        %s982 = ssub.s32 %s26, 2
        // Predicated region
        $region109: #{dgcnn_forward.2} parent=107 // pred_check
          %p983 = pneg %p275
        $region110: #{dgcnn_forward.2} parent=107 // pred_check_branch
          %985 = sbr.rel (%p983) target = $region112
        $region111: #{dgcnn_forward.2} parent=107 // pred_region
          %p986 = scmp.lt.s32.totalorder %s32, 1
          %s987 = scalar_select %p986, %s32, 1
          %s988 = smul.addr %s987, 2
          %s989 = smul.addr %s988, 8
          %s990 = scalar_lea.vmem %s10, %s989
        $region112: #{dgcnn_forward.2} parent=107 // pred_fallthru
          _
      $region108: #{dgcnn_forward.2} parent=5 // pred_fallthru
        _
    $region6: #{dgcnn_forward.2} parent=1 // loop_footer
      %s30 = sadd.s32 1, %s26
    $region7: #{dgcnn_forward.2} parent=1 // loop_footer_branch
      %25 = sbr.rel target = $region3
    $region8: #{dgcnn_forward.2} parent=1 // loop_exit
      _
    %991 = vsyncpa [#allocation3], 1
    %s992 = scalar_lea.sflag [#allocation3], 1
    %993 = vsyncpa %s992, 1
    %994 = vsyncpa [#allocation5], 1
    %s995 = scalar_lea.sflag [#allocation5], 1
    %996 = vsyncpa %s995, 1
    %997 = vsyncpa [#allocation8], 1
    %998 = vsyncpa [#allocation11], 1
    %999 = vsyncpa [#allocation14], 1
    %1000 = vsyncpa [#allocation17], 1

// kernel: dgcnn_forward.3
$region0: #{dgcnn_forward.3}
  #allocation0 [shape = 'u32[]', space=smem, size = 0x4, offset = 0x4, fixed_abs, tag = 'smem constant byte address 0x4 - core index']
  #allocation1 [shape = 'u32[72,128]{1,0:T(1,128)}', space=vmem, size = 0x9000, scoped, tag = 'internal scratch']
  %s0 = inlined_call_operand.vmem [shape: bf16[128,128], index: 0, kind: input, shape index: {}]
  %s1 = inlined_call_operand.vmem [shape: bf16[5,128,8], index: 1, kind: input, shape index: {}]
  %s2 = inlined_call_operand.vmem [shape: f32[1,8], index: 2, kind: input, shape index: {}]
  %s3 = inlined_call_operand.vmem [shape: bf16[48,123], index: 3, kind: input, shape index: {}]
  %s4 = inlined_call_operand.vmem [shape: bf16[5,8,16], index: 4, kind: input, shape index: {}]
  %s5 = inlined_call_operand.vmem [shape: f32[1,16], index: 5, kind: input, shape index: {}]
  %s6 = inlined_call_operand.vmem [shape: bf16[16,44], index: 6, kind: input, shape index: {}]
  %s7 = inlined_call_operand.vmem [shape: bf16[32,32], index: 7, kind: input, shape index: {}]
  %s8 = inlined_call_operand.vmem [shape: f32[1,32], index: 8, kind: input, shape index: {}]
  %s9 = inlined_call_operand.vmem [shape: bf16[32,128], index: 9, kind: input, shape index: {}]
  %s10 = inlined_call_operand.vmem [shape: f32[1,128], index: 10, kind: input, shape index: {}]
  %s11 = inlined_call_operand.vmem [shape: f32[8,128], index: 11, kind: output, shape index: {}]
  %s12 = sld [smem:[#allocation0]]
  $region54: #{dgcnn_forward.3} parent=0
    _
  %s14 = ssub.s32 1, %s12
  %s15 = scalar_select 0, %s14, %s12
  // Predicated region
  $region2: #{dgcnn_forward.3} parent=0 // pred_check
    _
  $region3: #{dgcnn_forward.3} parent=0 // pred_check_branch
    %17 = sbr.rel (0) target = $region5
  $region4: #{dgcnn_forward.3} parent=0 // pred_region
    _
  $region5: #{dgcnn_forward.3} parent=0 // pred_fallthru
    _
  // Predicated region
  $region6: #{dgcnn_forward.3} parent=0 // pred_check
    _
  $region7: #{dgcnn_forward.3} parent=0 // pred_check_branch
    %19 = sbr.rel (0) target = $region9
  $region8: #{dgcnn_forward.3} parent=0 // pred_region
    _
  $region9: #{dgcnn_forward.3} parent=0 // pred_fallthru
    _
  // Predicated region
  $region10: #{dgcnn_forward.3} parent=0 // pred_check
    _
  $region11: #{dgcnn_forward.3} parent=0 // pred_check_branch
    %21 = sbr.rel (0) target = $region13
  $region12: #{dgcnn_forward.3} parent=0 // pred_region
    _
  $region13: #{dgcnn_forward.3} parent=0 // pred_fallthru
    _
  // Predicated region
  $region14: #{dgcnn_forward.3} parent=0 // pred_check
    _
  $region15: #{dgcnn_forward.3} parent=0 // pred_check_branch
    %23 = sbr.rel (0) target = $region17
  $region16: #{dgcnn_forward.3} parent=0 // pred_region
    _
  $region17: #{dgcnn_forward.3} parent=0 // pred_fallthru
    _
  // Predicated region
  $region18: #{dgcnn_forward.3} parent=0 // pred_check
    _
  $region19: #{dgcnn_forward.3} parent=0 // pred_check_branch
    %25 = sbr.rel (0) target = $region21
  $region20: #{dgcnn_forward.3} parent=0 // pred_region
    _
  $region21: #{dgcnn_forward.3} parent=0 // pred_fallthru
    _
  // Predicated region
  $region22: #{dgcnn_forward.3} parent=0 // pred_check
    _
  $region23: #{dgcnn_forward.3} parent=0 // pred_check_branch
    %27 = sbr.rel (0) target = $region25
  $region24: #{dgcnn_forward.3} parent=0 // pred_region
    _
  $region25: #{dgcnn_forward.3} parent=0 // pred_fallthru
    _
  // Predicated region
  $region26: #{dgcnn_forward.3} parent=0 // pred_check
    _
  $region27: #{dgcnn_forward.3} parent=0 // pred_check_branch
    %29 = sbr.rel (0) target = $region29
  $region28: #{dgcnn_forward.3} parent=0 // pred_region
    _
  $region29: #{dgcnn_forward.3} parent=0 // pred_fallthru
    _
  // Predicated region
  $region30: #{dgcnn_forward.3} parent=0 // pred_check
    _
  $region31: #{dgcnn_forward.3} parent=0 // pred_check_branch
    %31 = sbr.rel (0) target = $region33
  $region32: #{dgcnn_forward.3} parent=0 // pred_region
    _
  $region33: #{dgcnn_forward.3} parent=0 // pred_fallthru
    _
  // Predicated region
  $region34: #{dgcnn_forward.3} parent=0 // pred_check
    _
  $region35: #{dgcnn_forward.3} parent=0 // pred_check_branch
    %33 = sbr.rel (0) target = $region37
  $region36: #{dgcnn_forward.3} parent=0 // pred_region
    _
  $region37: #{dgcnn_forward.3} parent=0 // pred_fallthru
    _
  // Predicated region
  $region38: #{dgcnn_forward.3} parent=0 // pred_check
    _
  $region39: #{dgcnn_forward.3} parent=0 // pred_check_branch
    %35 = sbr.rel (0) target = $region41
  $region40: #{dgcnn_forward.3} parent=0 // pred_region
    _
  $region41: #{dgcnn_forward.3} parent=0 // pred_fallthru
    _
  // Predicated region
  $region42: #{dgcnn_forward.3} parent=0 // pred_check
    _
  $region43: #{dgcnn_forward.3} parent=0 // pred_check_branch
    %37 = sbr.rel (0) target = $region45
  $region44: #{dgcnn_forward.3} parent=0 // pred_region
    _
  $region45: #{dgcnn_forward.3} parent=0 // pred_fallthru
    _
  %v39 = vld [vmem:[%s0] sm:$0xf]
  %v40 = vld [vmem:[%s0 + $0x4] sm:$0xf]
  %v41 = vld [vmem:[%s0 + $0x8] sm:$0xf]
  %v42 = vld [vmem:[%s0 + $0xc] sm:$0xf]
  %v43 = vld [vmem:[%s0 + $0x10] sm:$0xf]
  %v44 = vld [vmem:[%s0 + $0x14] sm:$0xf]
  %v45 = vld [vmem:[%s0 + $0x18] sm:$0xf]
  %v46 = vld [vmem:[%s0 + $0x1c] sm:$0xf]
  %v47 = vld [vmem:[%s0 + $0x20] sm:$0xf]
  %v48 = vld [vmem:[%s0 + $0x24] sm:$0xf]
  %v49 = vld [vmem:[%s0 + $0x28] sm:$0xf]
  %v50 = vld [vmem:[%s0 + $0x2c] sm:$0xf]
  %v51 = vld [vmem:[%s0 + $0x30] sm:$0xf]
  %v52 = vld [vmem:[%s0 + $0x34] sm:$0xf]
  %v53 = vld [vmem:[%s0 + $0x38] sm:$0xf]
  %v54 = vld [vmem:[%s0 + $0x3c] sm:$0xf]
  %v55 = vld [vmem:[%s1] sm:$0xf]
  %v56 = vld [vmem:[%s1 + $0x4] sm:$0xf]
  %v57 = vld [vmem:[%s1 + $0x8] sm:$0xf]
  %v58 = vld [vmem:[%s1 + $0xc] sm:$0xf]
  %v59 = vld [vmem:[%s1 + $0x10] sm:$0xf]
  %v60 = vld [vmem:[%s1 + $0x14] sm:$0xf]
  %v61 = vld [vmem:[%s1 + $0x18] sm:$0xf]
  %v62 = vld [vmem:[%s1 + $0x1c] sm:$0xf]
  %v63 = vld [vmem:[%s1 + $0x20] sm:$0xf]
  %v64 = vld [vmem:[%s1 + $0x24] sm:$0xf]
  %v65 = vld [vmem:[%s1 + $0x28] sm:$0xf]
  %v66 = vld [vmem:[%s1 + $0x2c] sm:$0xf]
  %v67 = vld [vmem:[%s1 + $0x30] sm:$0xf]
  %v68 = vld [vmem:[%s1 + $0x34] sm:$0xf]
  %v69 = vld [vmem:[%s1 + $0x38] sm:$0xf]
  %v70 = vld [vmem:[%s1 + $0x3c] sm:$0xf]
  %s71 = scalar_lea.vmem %s1, 64
  %v72 = vld [vmem:[%s71] sm:$0xf]
  %v73 = vld [vmem:[%s71 + $0x4] sm:$0xf]
  %v74 = vld [vmem:[%s71 + $0x8] sm:$0xf]
  %v75 = vld [vmem:[%s71 + $0xc] sm:$0xf]
  %v76 = vld [vmem:[%s71 + $0x10] sm:$0xf]
  %v77 = vld [vmem:[%s71 + $0x14] sm:$0xf]
  %v78 = vld [vmem:[%s71 + $0x18] sm:$0xf]
  %v79 = vld [vmem:[%s71 + $0x1c] sm:$0xf]
  %v80 = vld [vmem:[%s71 + $0x20] sm:$0xf]
  %v81 = vld [vmem:[%s71 + $0x24] sm:$0xf]
  %v82 = vld [vmem:[%s71 + $0x28] sm:$0xf]
  %v83 = vld [vmem:[%s71 + $0x2c] sm:$0xf]
  %v84 = vld [vmem:[%s71 + $0x30] sm:$0xf]
  %v85 = vld [vmem:[%s71 + $0x34] sm:$0xf]
  %v86 = vld [vmem:[%s71 + $0x38] sm:$0xf]
  %v87 = vld [vmem:[%s71 + $0x3c] sm:$0xf]
  %v104 = vunpack.c.l.b16 %v39
  %v105 = vunpack.c.l.b16 %v40
  %v106 = vunpack.c.l.b16 %v41
  %v107 = vunpack.c.l.b16 %v42
  %v108 = vunpack.c.l.b16 %v43
  %v109 = vunpack.c.l.b16 %v44
  %v110 = vunpack.c.l.b16 %v45
  %v111 = vunpack.c.l.b16 %v46
  %v112 = vunpack.c.l.b16 %v47
  %v113 = vunpack.c.l.b16 %v48
  %v114 = vunpack.c.l.b16 %v49
  %v115 = vunpack.c.l.b16 %v50
  %v116 = vunpack.c.l.b16 %v51
  %v117 = vunpack.c.l.b16 %v52
  %v118 = vunpack.c.l.b16 %v53
  %v119 = vunpack.c.l.b16 %v54
  %v120 = vpack.c.b16 %v105, %v104
  %v121 = vpack.c.b16 %v107, %v106
  %v122 = vpack.c.b16 %v109, %v108
  %v123 = vpack.c.b16 %v111, %v110
  %v124 = vpack.c.b16 %v113, %v112
  %v125 = vpack.c.b16 %v115, %v114
  %v126 = vpack.c.b16 %v117, %v116
  %v127 = vpack.c.b16 %v119, %v118
  %vm128 = vsmask.f32 7424
  %v130 = vshrl.u32 %v120, 16
  %v132 = vshll.u32 %v120, 16
  %v134 = vrot.slane %v132, 1
  %v135 = vor.u32 %v130, %v134
  %v137 = vshll.u32 %v121, 16
  %v139 = vrot.slane %v137, 1
  %v140 = vsel %vm128, %v135, %v139
  %v141 = vshrl.u32 %v121, 16
  %v143 = vor.u32 %v141, %v139
  %v145 = vshll.u32 %v122, 16
  %v147 = vrot.slane %v145, 1
  %v148 = vsel %vm128, %v143, %v147
  %v149 = vshrl.u32 %v122, 16
  %v151 = vor.u32 %v149, %v147
  %v153 = vshll.u32 %v123, 16
  %v155 = vrot.slane %v153, 1
  %v156 = vsel %vm128, %v151, %v155
  %v157 = vshrl.u32 %v123, 16
  %v159 = vor.u32 %v157, %v155
  %v161 = vshll.u32 %v124, 16
  %v163 = vrot.slane %v161, 1
  %v164 = vsel %vm128, %v159, %v163
  %v165 = vshrl.u32 %v124, 16
  %v167 = vor.u32 %v165, %v163
  %v169 = vshll.u32 %v125, 16
  %v171 = vrot.slane %v169, 1
  %v172 = vsel %vm128, %v167, %v171
  %v173 = vshrl.u32 %v125, 16
  %v175 = vor.u32 %v173, %v171
  %v177 = vshll.u32 %v126, 16
  %v179 = vrot.slane %v177, 1
  %v180 = vsel %vm128, %v175, %v179
  %v181 = vshrl.u32 %v126, 16
  %v183 = vor.u32 %v181, %v179
  %v185 = vshll.u32 %v127, 16
  %v187 = vrot.slane %v185, 1
  %v188 = vsel %vm128, %v183, %v187
  %v189 = vshrl.u32 %v127, 16
  %v191 = vor.u32 %v189, %v187
  %v216 = vunpack.c.l.b16 %v72
  %v217 = vunpack.c.l.b16 %v73
  %v218 = vunpack.c.l.b16 %v74
  %v219 = vunpack.c.l.b16 %v75
  %v220 = vunpack.c.l.b16 %v76
  %v221 = vunpack.c.l.b16 %v77
  %v222 = vunpack.c.l.b16 %v78
  %v223 = vunpack.c.l.b16 %v79
  %v224 = vunpack.c.l.b16 %v80
  %v225 = vunpack.c.l.b16 %v81
  %v226 = vunpack.c.l.b16 %v82
  %v227 = vunpack.c.l.b16 %v83
  %v228 = vunpack.c.l.b16 %v84
  %v229 = vunpack.c.l.b16 %v85
  %v230 = vunpack.c.l.b16 %v86
  %v231 = vunpack.c.l.b16 %v87
  %v232 = vpack.c.b16 %v217, %v216
  %v233 = vpack.c.b16 %v219, %v218
  %v234 = vpack.c.b16 %v221, %v220
  %v235 = vpack.c.b16 %v223, %v222
  %v236 = vpack.c.b16 %v225, %v224
  %v237 = vpack.c.b16 %v227, %v226
  %v238 = vpack.c.b16 %v229, %v228
  %v239 = vpack.c.b16 %v231, %v230
  %248 = vmatpush.bf16.msra.mxu0 %v239
  %249 = vmatpush.bf16.msra.mxu0 %v238
  %250 = vmatpush.bf16.msra.mxu0 %v237
  %251 = vmatpush.bf16.msra.mxu0 %v236
  %252 = vmatpush.bf16.msra.mxu0 %v235
  %253 = vmatpush.bf16.msra.mxu0 %v234
  %254 = vmatpush.bf16.msra.mxu0 %v233
  %255 = vmatpush.bf16.msra.mxu0 %v232
  %256 = vmatmul.bf16.gmra.mxu0 %v140
  %v257 = vpop.f32.mrf.mxu0
  %v258 = vadd.f32 0.0, %v257
  %v259 = vpop.f32.mrf.mxu0
  %v260 = vadd.f32 0.0, %v259
  %261 = vmatmul.bf16.gmra.mxu0 %v148
  %v262 = vpop.f32.mrf.mxu0
  %v263 = vadd.f32 0.0, %v262
  %v264 = vpop.f32.mrf.mxu0
  %v265 = vadd.f32 0.0, %v264
  %266 = vmatmul.bf16.gmra.mxu0 %v156
  %v267 = vpop.f32.mrf.mxu0
  %v268 = vadd.f32 0.0, %v267
  %v269 = vpop.f32.mrf.mxu0
  %v270 = vadd.f32 0.0, %v269
  %271 = vmatmul.bf16.gmra.mxu0 %v164
  %v272 = vpop.f32.mrf.mxu0
  %v273 = vadd.f32 0.0, %v272
  %v274 = vpop.f32.mrf.mxu0
  %v275 = vadd.f32 0.0, %v274
  %276 = vmatmul.bf16.gmra.mxu0 %v172
  %v277 = vpop.f32.mrf.mxu0
  %v278 = vadd.f32 0.0, %v277
  %v279 = vpop.f32.mrf.mxu0
  %v280 = vadd.f32 0.0, %v279
  %281 = vmatmul.bf16.gmra.mxu0 %v180
  %v282 = vpop.f32.mrf.mxu0
  %v283 = vadd.f32 0.0, %v282
  %v284 = vpop.f32.mrf.mxu0
  %v285 = vadd.f32 0.0, %v284
  %286 = vmatmul.bf16.gmra.mxu0 %v188
  %v287 = vpop.f32.mrf.mxu0
  %v288 = vadd.f32 0.0, %v287
  %v289 = vpop.f32.mrf.mxu0
  %v290 = vadd.f32 0.0, %v289
  %291 = vmatmul.bf16.gmra.mxu0 %v191
  %v292 = vpop.f32.mrf.mxu0
  %v293 = vadd.f32 0.0, %v292
  %v294 = vpop.f32.mrf.mxu0
  %v295 = vadd.f32 0.0, %v294
  %296 = vdwg.mxu0
  %v321 = vunpack.c.l.b16 %v55
  %v322 = vunpack.c.l.b16 %v56
  %v323 = vunpack.c.l.b16 %v57
  %v324 = vunpack.c.l.b16 %v58
  %v325 = vunpack.c.l.b16 %v59
  %v326 = vunpack.c.l.b16 %v60
  %v327 = vunpack.c.l.b16 %v61
  %v328 = vunpack.c.l.b16 %v62
  %v329 = vunpack.c.l.b16 %v63
  %v330 = vunpack.c.l.b16 %v64
  %v331 = vunpack.c.l.b16 %v65
  %v332 = vunpack.c.l.b16 %v66
  %v333 = vunpack.c.l.b16 %v67
  %v334 = vunpack.c.l.b16 %v68
  %v335 = vunpack.c.l.b16 %v69
  %v336 = vunpack.c.l.b16 %v70
  %v337 = vpack.c.b16 %v322, %v321
  %v338 = vpack.c.b16 %v324, %v323
  %v339 = vpack.c.b16 %v326, %v325
  %v340 = vpack.c.b16 %v328, %v327
  %v341 = vpack.c.b16 %v330, %v329
  %v342 = vpack.c.b16 %v332, %v331
  %v343 = vpack.c.b16 %v334, %v333
  %v344 = vpack.c.b16 %v336, %v335
  %353 = vmatpush.bf16.msra.mxu0 %v344
  %354 = vmatpush.bf16.msra.mxu0 %v343
  %355 = vmatpush.bf16.msra.mxu0 %v342
  %356 = vmatpush.bf16.msra.mxu0 %v341
  %357 = vmatpush.bf16.msra.mxu0 %v340
  %358 = vmatpush.bf16.msra.mxu0 %v339
  %359 = vmatpush.bf16.msra.mxu0 %v338
  %360 = vmatpush.bf16.msra.mxu0 %v337
  %361 = vmatmul.bf16.gmra.mxu0 %v120
  %v362 = vpop.f32.mrf.mxu0
  %v363 = vadd.f32 %v258, %v362
  %v364 = vpop.f32.mrf.mxu0
  %v365 = vadd.f32 %v260, %v364
  %366 = vmatmul.bf16.gmra.mxu0 %v121
  %v367 = vpop.f32.mrf.mxu0
  %v368 = vadd.f32 %v263, %v367
  %v369 = vpop.f32.mrf.mxu0
  %v370 = vadd.f32 %v265, %v369
  %371 = vmatmul.bf16.gmra.mxu0 %v122
  %v372 = vpop.f32.mrf.mxu0
  %v373 = vadd.f32 %v268, %v372
  %v374 = vpop.f32.mrf.mxu0
  %v375 = vadd.f32 %v270, %v374
  %376 = vmatmul.bf16.gmra.mxu0 %v123
  %v377 = vpop.f32.mrf.mxu0
  %v378 = vadd.f32 %v273, %v377
  %v379 = vpop.f32.mrf.mxu0
  %v380 = vadd.f32 %v275, %v379
  %381 = vmatmul.bf16.gmra.mxu0 %v124
  %v382 = vpop.f32.mrf.mxu0
  %v383 = vadd.f32 %v278, %v382
  %v384 = vpop.f32.mrf.mxu0
  %v385 = vadd.f32 %v280, %v384
  %386 = vmatmul.bf16.gmra.mxu0 %v125
  %v387 = vpop.f32.mrf.mxu0
  %v388 = vadd.f32 %v283, %v387
  %v389 = vpop.f32.mrf.mxu0
  %v390 = vadd.f32 %v285, %v389
  %391 = vmatmul.bf16.gmra.mxu0 %v126
  %v392 = vpop.f32.mrf.mxu0
  %v393 = vadd.f32 %v288, %v392
  %v394 = vpop.f32.mrf.mxu0
  %v395 = vadd.f32 %v290, %v394
  %396 = vmatmul.bf16.gmra.mxu0 %v127
  %v397 = vpop.f32.mrf.mxu0
  %v398 = vadd.f32 %v293, %v397
  %v399 = vpop.f32.mrf.mxu0
  %v400 = vadd.f32 %v295, %v399
  %401 = vdwg.mxu0
  %s402 = scalar_lea.vmem %s1, 128
  %v403 = vld [vmem:[%s402] sm:$0xf]
  %v404 = vld [vmem:[%s402 + $0x4] sm:$0xf]
  %v405 = vld [vmem:[%s402 + $0x8] sm:$0xf]
  %v406 = vld [vmem:[%s402 + $0xc] sm:$0xf]
  %v407 = vld [vmem:[%s402 + $0x10] sm:$0xf]
  %v408 = vld [vmem:[%s402 + $0x14] sm:$0xf]
  %v409 = vld [vmem:[%s402 + $0x18] sm:$0xf]
  %v410 = vld [vmem:[%s402 + $0x1c] sm:$0xf]
  %v411 = vld [vmem:[%s402 + $0x20] sm:$0xf]
  %v412 = vld [vmem:[%s402 + $0x24] sm:$0xf]
  %v413 = vld [vmem:[%s402 + $0x28] sm:$0xf]
  %v414 = vld [vmem:[%s402 + $0x2c] sm:$0xf]
  %v415 = vld [vmem:[%s402 + $0x30] sm:$0xf]
  %v416 = vld [vmem:[%s402 + $0x34] sm:$0xf]
  %v417 = vld [vmem:[%s402 + $0x38] sm:$0xf]
  %v418 = vld [vmem:[%s402 + $0x3c] sm:$0xf]
  %vm419 = vcmask 1046528
  %v420 = vrot.slane %v120, 1
  %v421 = vrot.slane %v121, 1
  %v422 = vsel %vm419, %v420, %v421
  %v423 = vrot.slane %v122, 1
  %v424 = vsel %vm419, %v421, %v423
  %v425 = vrot.slane %v123, 1
  %v426 = vsel %vm419, %v423, %v425
  %v427 = vrot.slane %v124, 1
  %v428 = vsel %vm419, %v425, %v427
  %v429 = vrot.slane %v125, 1
  %v430 = vsel %vm419, %v427, %v429
  %v431 = vrot.slane %v126, 1
  %v432 = vsel %vm419, %v429, %v431
  %v433 = vrot.slane %v127, 1
  %v434 = vsel %vm419, %v431, %v433
  %v459 = vunpack.c.l.b16 %v403
  %v460 = vunpack.c.l.b16 %v404
  %v461 = vunpack.c.l.b16 %v405
  %v462 = vunpack.c.l.b16 %v406
  %v463 = vunpack.c.l.b16 %v407
  %v464 = vunpack.c.l.b16 %v408
  %v465 = vunpack.c.l.b16 %v409
  %v466 = vunpack.c.l.b16 %v410
  %v467 = vunpack.c.l.b16 %v411
  %v468 = vunpack.c.l.b16 %v412
  %v469 = vunpack.c.l.b16 %v413
  %v470 = vunpack.c.l.b16 %v414
  %v471 = vunpack.c.l.b16 %v415
  %v472 = vunpack.c.l.b16 %v416
  %v473 = vunpack.c.l.b16 %v417
  %v474 = vunpack.c.l.b16 %v418
  %v475 = vpack.c.b16 %v460, %v459
  %v476 = vpack.c.b16 %v462, %v461
  %v477 = vpack.c.b16 %v464, %v463
  %v478 = vpack.c.b16 %v466, %v465
  %v479 = vpack.c.b16 %v468, %v467
  %v480 = vpack.c.b16 %v470, %v469
  %v481 = vpack.c.b16 %v472, %v471
  %v482 = vpack.c.b16 %v474, %v473
  %491 = vmatpush.bf16.msra.mxu0 %v482
  %492 = vmatpush.bf16.msra.mxu0 %v481
  %493 = vmatpush.bf16.msra.mxu0 %v480
  %494 = vmatpush.bf16.msra.mxu0 %v479
  %495 = vmatpush.bf16.msra.mxu0 %v478
  %496 = vmatpush.bf16.msra.mxu0 %v477
  %497 = vmatpush.bf16.msra.mxu0 %v476
  %498 = vmatpush.bf16.msra.mxu0 %v475
  %499 = vmatmul.bf16.gmra.mxu0 %v422
  %v500 = vpop.f32.mrf.mxu0
  %v501 = vadd.f32 0.0, %v500
  %v502 = vpop.f32.mrf.mxu0
  %v503 = vadd.f32 0.0, %v502
  %504 = vmatmul.bf16.gmra.mxu0 %v424
  %v505 = vpop.f32.mrf.mxu0
  %v506 = vadd.f32 0.0, %v505
  %v507 = vpop.f32.mrf.mxu0
  %v508 = vadd.f32 0.0, %v507
  %509 = vmatmul.bf16.gmra.mxu0 %v426
  %v510 = vpop.f32.mrf.mxu0
  %v511 = vadd.f32 0.0, %v510
  %v512 = vpop.f32.mrf.mxu0
  %v513 = vadd.f32 0.0, %v512
  %514 = vmatmul.bf16.gmra.mxu0 %v428
  %v515 = vpop.f32.mrf.mxu0
  %v516 = vadd.f32 0.0, %v515
  %v517 = vpop.f32.mrf.mxu0
  %v518 = vadd.f32 0.0, %v517
  %519 = vmatmul.bf16.gmra.mxu0 %v430
  %v520 = vpop.f32.mrf.mxu0
  %v521 = vadd.f32 0.0, %v520
  %v522 = vpop.f32.mrf.mxu0
  %v523 = vadd.f32 0.0, %v522
  %524 = vmatmul.bf16.gmra.mxu0 %v432
  %v525 = vpop.f32.mrf.mxu0
  %v526 = vadd.f32 0.0, %v525
  %v527 = vpop.f32.mrf.mxu0
  %v528 = vadd.f32 0.0, %v527
  %529 = vmatmul.bf16.gmra.mxu0 %v434
  %v530 = vpop.f32.mrf.mxu0
  %v531 = vadd.f32 0.0, %v530
  %v532 = vpop.f32.mrf.mxu0
  %v533 = vadd.f32 0.0, %v532
  %534 = vmatmul.bf16.gmra.mxu0 %v433
  %v535 = vpop.f32.mrf.mxu0
  %v536 = vadd.f32 0.0, %v535
  %v537 = vpop.f32.mrf.mxu0
  %v538 = vadd.f32 0.0, %v537
  %539 = vdwg.mxu0
  %v540 = vadd.f32 %v363, %v501
  %v541 = vadd.f32 %v365, %v503
  %v542 = vadd.f32 %v368, %v506
  %v543 = vadd.f32 %v370, %v508
  %v544 = vadd.f32 %v373, %v511
  %v545 = vadd.f32 %v375, %v513
  %v546 = vadd.f32 %v378, %v516
  %v547 = vadd.f32 %v380, %v518
  %v548 = vadd.f32 %v383, %v521
  %v549 = vadd.f32 %v385, %v523
  %v550 = vadd.f32 %v388, %v526
  %v551 = vadd.f32 %v390, %v528
  %v552 = vadd.f32 %v393, %v531
  %v553 = vadd.f32 %v395, %v533
  %v554 = vadd.f32 %v398, %v536
  %v555 = vadd.f32 %v400, %v538
  %s556 = scalar_lea.vmem %s1, 192
  %v557 = vld [vmem:[%s556] sm:$0xf]
  %v558 = vld [vmem:[%s556 + $0x4] sm:$0xf]
  %v559 = vld [vmem:[%s556 + $0x8] sm:$0xf]
  %v560 = vld [vmem:[%s556 + $0xc] sm:$0xf]
  %v561 = vld [vmem:[%s556 + $0x10] sm:$0xf]
  %v562 = vld [vmem:[%s556 + $0x14] sm:$0xf]
  %v563 = vld [vmem:[%s556 + $0x18] sm:$0xf]
  %v564 = vld [vmem:[%s556 + $0x1c] sm:$0xf]
  %v565 = vld [vmem:[%s556 + $0x20] sm:$0xf]
  %v566 = vld [vmem:[%s556 + $0x24] sm:$0xf]
  %v567 = vld [vmem:[%s556 + $0x28] sm:$0xf]
  %v568 = vld [vmem:[%s556 + $0x2c] sm:$0xf]
  %v569 = vld [vmem:[%s556 + $0x30] sm:$0xf]
  %v570 = vld [vmem:[%s556 + $0x34] sm:$0xf]
  %v571 = vld [vmem:[%s556 + $0x38] sm:$0xf]
  %v572 = vld [vmem:[%s556 + $0x3c] sm:$0xf]
  %vm573 = vsmask.f32 6400
  %v574 = vrot.slane %v130, 1
  %v575 = vrot.slane %v132, 2
  %v576 = vor.u32 %v574, %v575
  %v577 = vrot.slane %v141, 1
  %v578 = vrot.slane %v137, 2
  %v579 = vor.u32 %v577, %v578
  %v580 = vsel %vm573, %v576, %v579
  %v581 = vrot.slane %v149, 1
  %v582 = vrot.slane %v145, 2
  %v583 = vor.u32 %v581, %v582
  %v584 = vsel %vm573, %v579, %v583
  %v585 = vrot.slane %v157, 1
  %v586 = vrot.slane %v153, 2
  %v587 = vor.u32 %v585, %v586
  %v588 = vsel %vm573, %v583, %v587
  %v589 = vrot.slane %v165, 1
  %v590 = vrot.slane %v161, 2
  %v591 = vor.u32 %v589, %v590
  %v592 = vsel %vm573, %v587, %v591
  %v593 = vrot.slane %v173, 1
  %v594 = vrot.slane %v169, 2
  %v595 = vor.u32 %v593, %v594
  %v596 = vsel %vm573, %v591, %v595
  %v597 = vrot.slane %v181, 1
  %v598 = vrot.slane %v177, 2
  %v599 = vor.u32 %v597, %v598
  %v600 = vsel %vm573, %v595, %v599
  %v601 = vrot.slane %v189, 1
  %v602 = vrot.slane %v185, 2
  %v603 = vor.u32 %v601, %v602
  %v604 = vsel %vm573, %v599, %v603
  %v629 = vunpack.c.l.b16 %v557
  %v630 = vunpack.c.l.b16 %v558
  %v631 = vunpack.c.l.b16 %v559
  %v632 = vunpack.c.l.b16 %v560
  %v633 = vunpack.c.l.b16 %v561
  %v634 = vunpack.c.l.b16 %v562
  %v635 = vunpack.c.l.b16 %v563
  %v636 = vunpack.c.l.b16 %v564
  %v637 = vunpack.c.l.b16 %v565
  %v638 = vunpack.c.l.b16 %v566
  %v639 = vunpack.c.l.b16 %v567
  %v640 = vunpack.c.l.b16 %v568
  %v641 = vunpack.c.l.b16 %v569
  %v642 = vunpack.c.l.b16 %v570
  %v643 = vunpack.c.l.b16 %v571
  %v644 = vunpack.c.l.b16 %v572
  %v645 = vpack.c.b16 %v630, %v629
  %v646 = vpack.c.b16 %v632, %v631
  %v647 = vpack.c.b16 %v634, %v633
  %v648 = vpack.c.b16 %v636, %v635
  %v649 = vpack.c.b16 %v638, %v637
  %v650 = vpack.c.b16 %v640, %v639
  %v651 = vpack.c.b16 %v642, %v641
  %v652 = vpack.c.b16 %v644, %v643
  %661 = vmatpush.bf16.msra.mxu0 %v652
  %662 = vmatpush.bf16.msra.mxu0 %v651
  %663 = vmatpush.bf16.msra.mxu0 %v650
  %664 = vmatpush.bf16.msra.mxu0 %v649
  %665 = vmatpush.bf16.msra.mxu0 %v648
  %666 = vmatpush.bf16.msra.mxu0 %v647
  %667 = vmatpush.bf16.msra.mxu0 %v646
  %668 = vmatpush.bf16.msra.mxu0 %v645
  %669 = vmatmul.bf16.gmra.mxu0 %v580
  %v670 = vpop.f32.mrf.mxu0
  %v671 = vadd.f32 0.0, %v670
  %v672 = vpop.f32.mrf.mxu0
  %v673 = vadd.f32 0.0, %v672
  %674 = vmatmul.bf16.gmra.mxu0 %v584
  %v675 = vpop.f32.mrf.mxu0
  %v676 = vadd.f32 0.0, %v675
  %v677 = vpop.f32.mrf.mxu0
  %v678 = vadd.f32 0.0, %v677
  %679 = vmatmul.bf16.gmra.mxu0 %v588
  %v680 = vpop.f32.mrf.mxu0
  %v681 = vadd.f32 0.0, %v680
  %v682 = vpop.f32.mrf.mxu0
  %v683 = vadd.f32 0.0, %v682
  %684 = vmatmul.bf16.gmra.mxu0 %v592
  %v685 = vpop.f32.mrf.mxu0
  %v686 = vadd.f32 0.0, %v685
  %v687 = vpop.f32.mrf.mxu0
  %v688 = vadd.f32 0.0, %v687
  %689 = vmatmul.bf16.gmra.mxu0 %v596
  %v690 = vpop.f32.mrf.mxu0
  %v691 = vadd.f32 0.0, %v690
  %v692 = vpop.f32.mrf.mxu0
  %v693 = vadd.f32 0.0, %v692
  %694 = vmatmul.bf16.gmra.mxu0 %v600
  %v695 = vpop.f32.mrf.mxu0
  %v696 = vadd.f32 0.0, %v695
  %v697 = vpop.f32.mrf.mxu0
  %v698 = vadd.f32 0.0, %v697
  %699 = vmatmul.bf16.gmra.mxu0 %v604
  %v700 = vpop.f32.mrf.mxu0
  %v701 = vadd.f32 0.0, %v700
  %v702 = vpop.f32.mrf.mxu0
  %v703 = vadd.f32 0.0, %v702
  %704 = vmatmul.bf16.gmra.mxu0 %v603
  %v705 = vpop.f32.mrf.mxu0
  %v706 = vadd.f32 0.0, %v705
  %v707 = vpop.f32.mrf.mxu0
  %v708 = vadd.f32 0.0, %v707
  %709 = vdwg.mxu0
  %v710 = vadd.f32 %v540, %v671
  %v711 = vadd.f32 %v541, %v673
  %v712 = vadd.f32 %v542, %v676
  %v713 = vadd.f32 %v543, %v678
  %v714 = vadd.f32 %v544, %v681
  %v715 = vadd.f32 %v545, %v683
  %v716 = vadd.f32 %v546, %v686
  %v717 = vadd.f32 %v547, %v688
  %v718 = vadd.f32 %v548, %v691
  %v719 = vadd.f32 %v549, %v693
  %v720 = vadd.f32 %v550, %v696
  %v721 = vadd.f32 %v551, %v698
  %v722 = vadd.f32 %v552, %v701
  %v723 = vadd.f32 %v553, %v703
  %v724 = vadd.f32 %v554, %v706
  %v725 = vadd.f32 %v555, %v708
  %s726 = scalar_lea.vmem %s1, 256
  %v727 = vld [vmem:[%s726] sm:$0xf]
  %v728 = vld [vmem:[%s726 + $0x4] sm:$0xf]
  %v729 = vld [vmem:[%s726 + $0x8] sm:$0xf]
  %v730 = vld [vmem:[%s726 + $0xc] sm:$0xf]
  %v731 = vld [vmem:[%s726 + $0x10] sm:$0xf]
  %v732 = vld [vmem:[%s726 + $0x14] sm:$0xf]
  %v733 = vld [vmem:[%s726 + $0x18] sm:$0xf]
  %v734 = vld [vmem:[%s726 + $0x1c] sm:$0xf]
  %v735 = vld [vmem:[%s726 + $0x20] sm:$0xf]
  %v736 = vld [vmem:[%s726 + $0x24] sm:$0xf]
  %v737 = vld [vmem:[%s726 + $0x28] sm:$0xf]
  %v738 = vld [vmem:[%s726 + $0x2c] sm:$0xf]
  %v739 = vld [vmem:[%s726 + $0x30] sm:$0xf]
  %v740 = vld [vmem:[%s726 + $0x34] sm:$0xf]
  %v741 = vld [vmem:[%s726 + $0x38] sm:$0xf]
  %v742 = vld [vmem:[%s726 + $0x3c] sm:$0xf]
  %vm743 = vcmask 1045504
  %v744 = vrot.slane %v120, 2
  %v745 = vrot.slane %v121, 2
  %v746 = vsel %vm743, %v744, %v745
  %v747 = vrot.slane %v122, 2
  %v748 = vsel %vm743, %v745, %v747
  %v749 = vrot.slane %v123, 2
  %v750 = vsel %vm743, %v747, %v749
  %v751 = vrot.slane %v124, 2
  %v752 = vsel %vm743, %v749, %v751
  %v753 = vrot.slane %v125, 2
  %v754 = vsel %vm743, %v751, %v753
  %v755 = vrot.slane %v126, 2
  %v756 = vsel %vm743, %v753, %v755
  %v757 = vrot.slane %v127, 2
  %v758 = vsel %vm743, %v755, %v757
  %v783 = vunpack.c.l.b16 %v727
  %v784 = vunpack.c.l.b16 %v728
  %v785 = vunpack.c.l.b16 %v729
  %v786 = vunpack.c.l.b16 %v730
  %v787 = vunpack.c.l.b16 %v731
  %v788 = vunpack.c.l.b16 %v732
  %v789 = vunpack.c.l.b16 %v733
  %v790 = vunpack.c.l.b16 %v734
  %v791 = vunpack.c.l.b16 %v735
  %v792 = vunpack.c.l.b16 %v736
  %v793 = vunpack.c.l.b16 %v737
  %v794 = vunpack.c.l.b16 %v738
  %v795 = vunpack.c.l.b16 %v739
  %v796 = vunpack.c.l.b16 %v740
  %v797 = vunpack.c.l.b16 %v741
  %v798 = vunpack.c.l.b16 %v742
  %v799 = vpack.c.b16 %v784, %v783
  %v800 = vpack.c.b16 %v786, %v785
  %v801 = vpack.c.b16 %v788, %v787
  %v802 = vpack.c.b16 %v790, %v789
  %v803 = vpack.c.b16 %v792, %v791
  %v804 = vpack.c.b16 %v794, %v793
  %v805 = vpack.c.b16 %v796, %v795
  %v806 = vpack.c.b16 %v798, %v797
  %815 = vmatpush.bf16.msra.mxu0 %v806
  %816 = vmatpush.bf16.msra.mxu0 %v805
  %817 = vmatpush.bf16.msra.mxu0 %v804
  %818 = vmatpush.bf16.msra.mxu0 %v803
  %819 = vmatpush.bf16.msra.mxu0 %v802
  %820 = vmatpush.bf16.msra.mxu0 %v801
  %821 = vmatpush.bf16.msra.mxu0 %v800
  %822 = vmatpush.bf16.msra.mxu0 %v799
  %823 = vmatmul.bf16.gmra.mxu0 %v746
  %v824 = vpop.f32.mrf.mxu0
  %v825 = vadd.f32 0.0, %v824
  %v826 = vpop.f32.mrf.mxu0
  %v827 = vadd.f32 0.0, %v826
  %828 = vmatmul.bf16.gmra.mxu0 %v748
  %v829 = vpop.f32.mrf.mxu0
  %v830 = vadd.f32 0.0, %v829
  %v831 = vpop.f32.mrf.mxu0
  %v832 = vadd.f32 0.0, %v831
  %833 = vmatmul.bf16.gmra.mxu0 %v750
  %v834 = vpop.f32.mrf.mxu0
  %v835 = vadd.f32 0.0, %v834
  %v836 = vpop.f32.mrf.mxu0
  %v837 = vadd.f32 0.0, %v836
  %838 = vmatmul.bf16.gmra.mxu0 %v752
  %v839 = vpop.f32.mrf.mxu0
  %v840 = vadd.f32 0.0, %v839
  %v841 = vpop.f32.mrf.mxu0
  %v842 = vadd.f32 0.0, %v841
  %843 = vmatmul.bf16.gmra.mxu0 %v754
  %v844 = vpop.f32.mrf.mxu0
  %v845 = vadd.f32 0.0, %v844
  %v846 = vpop.f32.mrf.mxu0
  %v847 = vadd.f32 0.0, %v846
  %848 = vmatmul.bf16.gmra.mxu0 %v756
  %v849 = vpop.f32.mrf.mxu0
  %v850 = vadd.f32 0.0, %v849
  %v851 = vpop.f32.mrf.mxu0
  %v852 = vadd.f32 0.0, %v851
  %853 = vmatmul.bf16.gmra.mxu0 %v758
  %v854 = vpop.f32.mrf.mxu0
  %v855 = vadd.f32 0.0, %v854
  %v856 = vpop.f32.mrf.mxu0
  %v857 = vadd.f32 0.0, %v856
  %858 = vmatmul.bf16.gmra.mxu0 %v757
  %v859 = vpop.f32.mrf.mxu0
  %v860 = vadd.f32 0.0, %v859
  %v861 = vpop.f32.mrf.mxu0
  %v862 = vadd.f32 0.0, %v861
  %863 = vdwg.mxu0
  %v864 = vadd.f32 %v710, %v825
  %v865 = vadd.f32 %v711, %v827
  %v866 = vadd.f32 %v712, %v830
  %v867 = vadd.f32 %v713, %v832
  %v868 = vadd.f32 %v714, %v835
  %v869 = vadd.f32 %v715, %v837
  %v870 = vadd.f32 %v716, %v840
  %v871 = vadd.f32 %v717, %v842
  %v872 = vadd.f32 %v718, %v845
  %v873 = vadd.f32 %v719, %v847
  %v874 = vadd.f32 %v720, %v850
  %v875 = vadd.f32 %v721, %v852
  %v876 = vadd.f32 %v722, %v855
  %v877 = vadd.f32 %v723, %v857
  %v878 = vadd.f32 %v724, %v860
  %v879 = vadd.f32 %v725, %v862
  %v880 = vld [vmem:[%s2] sm:$0x1]
  %v882 = vperm.slane %v880, 0
  %v884 = vadd.f32 %v864, %v882
  %v885 = vadd.f32 %v865, %v882
  %v886 = vadd.f32 %v866, %v882
  %v887 = vadd.f32 %v867, %v882
  %v888 = vadd.f32 %v868, %v882
  %v889 = vadd.f32 %v869, %v882
  %v890 = vadd.f32 %v870, %v882
  %v891 = vadd.f32 %v871, %v882
  %v892 = vadd.f32 %v872, %v882
  %v893 = vadd.f32 %v873, %v882
  %v894 = vadd.f32 %v874, %v882
  %v895 = vadd.f32 %v875, %v882
  %v896 = vadd.f32 %v876, %v882
  %v897 = vadd.f32 %v877, %v882
  %v898 = vadd.f32 %v878, %v882
  %v899 = vadd.f32 %v879, %v882
  %v900 = vmax.f32 %v884, 0.0
  %v901 = vmax.f32 %v885, 0.0
  %v902 = vmax.f32 %v886, 0.0
  %v903 = vmax.f32 %v887, 0.0
  %v904 = vmax.f32 %v888, 0.0
  %v905 = vmax.f32 %v889, 0.0
  %v906 = vmax.f32 %v890, 0.0
  %v907 = vmax.f32 %v891, 0.0
  %v908 = vmax.f32 %v892, 0.0
  %v909 = vmax.f32 %v893, 0.0
  %v910 = vmax.f32 %v894, 0.0
  %v911 = vmax.f32 %v895, 0.0
  %v912 = vmax.f32 %v896, 0.0
  %v913 = vmax.f32 %v897, 0.0
  %v914 = vmax.f32 %v898, 0.0
  %v915 = vmax.f32 %v899, 0.0
  %vm932 = vcmask 1046528
  %v933 = vrot.slane %v900, 1
  %v934 = vrot.slane %v901, 1
  %v935 = vsel %vm932, %v933, %v934
  %v936 = vrot.slane %v902, 1
  %v937 = vsel %vm932, %v934, %v936
  %v938 = vrot.slane %v903, 1
  %v939 = vsel %vm932, %v936, %v938
  %v940 = vrot.slane %v904, 1
  %v941 = vsel %vm932, %v938, %v940
  %v942 = vrot.slane %v905, 1
  %v943 = vsel %vm932, %v940, %v942
  %v944 = vrot.slane %v906, 1
  %v945 = vsel %vm932, %v942, %v944
  %v946 = vrot.slane %v907, 1
  %v947 = vsel %vm932, %v944, %v946
  %v948 = vrot.slane %v908, 1
  %v949 = vsel %vm932, %v946, %v948
  %v950 = vrot.slane %v909, 1
  %v951 = vsel %vm932, %v948, %v950
  %v952 = vrot.slane %v910, 1
  %v953 = vsel %vm932, %v950, %v952
  %v954 = vrot.slane %v911, 1
  %v955 = vsel %vm932, %v952, %v954
  %v956 = vrot.slane %v912, 1
  %v957 = vsel %vm932, %v954, %v956
  %v958 = vrot.slane %v913, 1
  %v959 = vsel %vm932, %v956, %v958
  %v960 = vrot.slane %v914, 1
  %v961 = vsel %vm932, %v958, %v960
  %v962 = vrot.slane %v915, 1
  %v963 = vsel %vm932, %v960, %v962
  %v980 = vmax.f32 %v900, %v935
  %v981 = vmax.f32 %v901, %v937
  %v982 = vmax.f32 %v902, %v939
  %v983 = vmax.f32 %v903, %v941
  %v984 = vmax.f32 %v904, %v943
  %v985 = vmax.f32 %v905, %v945
  %v986 = vmax.f32 %v906, %v947
  %v987 = vmax.f32 %v907, %v949
  %v988 = vmax.f32 %v908, %v951
  %v989 = vmax.f32 %v909, %v953
  %v990 = vmax.f32 %v910, %v955
  %v991 = vmax.f32 %v911, %v957
  %v992 = vmax.f32 %v912, %v959
  %v993 = vmax.f32 %v913, %v961
  %v994 = vmax.f32 %v914, %v963
  %v995 = vmax.f32 %v915, %v962
  %v996 = vld [vmem:[%s3] sm:$0xf]
  %v997 = vld [vmem:[%s3 + $0x4] sm:$0xf]
  %v998 = vld [vmem:[%s3 + $0x8] sm:$0xf]
  %v999 = vld [vmem:[%s3 + $0xc] sm:$0xf]
  %v1000 = vld [vmem:[%s3 + $0x10] sm:$0xf]
  %v1001 = vld [vmem:[%s3 + $0x14] sm:$0xf]
  %v1002 = vpack.c.bf16 %v981, %v980
  %v1003 = vpack.c.bf16 %v983, %v982
  %v1004 = vpack.c.bf16 %v985, %v984
  %v1005 = vpack.c.bf16 %v987, %v986
  %v1006 = vpack.c.bf16 %v989, %v988
  %v1007 = vpack.c.bf16 %v991, %v990
  %v1008 = vpack.c.bf16 %v993, %v992
  %v1009 = vpack.c.bf16 %v995, %v994
  %v1016 = vunpack.c.l.b16 %v996
  %v1017 = vunpack.c.l.b16 %v997
  %v1018 = vunpack.c.l.b16 %v998
  %v1019 = vunpack.c.l.b16 %v999
  %v1020 = vunpack.c.l.b16 %v1000
  %v1021 = vunpack.c.l.b16 %v1001
  %v1022 = vpack.c.b16 %v1017, %v1016
  %v1023 = vpack.c.b16 %v1019, %v1018
  %v1024 = vpack.c.b16 %v1021, %v1020
  %vm1025 = vcmask 1006592
  %v1027 = vsel %vm1025, %v1022, 0
  %v1030 = vsel %vm1025, %v1023, 0
  %v1033 = vsel %vm1025, %v1024, 0
  %vm1035 = vcmask 1044480
  %vm1036 = vcmask 1045504
  %v1037 = vsel %vm1035, 4294967295, 65535
  %v1038 = vsel %vm1036, %v1037, 0
  %v1040 = vand.u32 %v1009, %v1038
  %1042 = vmatpush.bf16.msra.mxu0 %v1040
  %1043 = vmatpush.bf16.msra.mxu0 %v1008
  %1044 = vmatpush.bf16.msra.mxu0 %v1007
  %1045 = vmatpush.bf16.msra.mxu0 %v1006
  %1046 = vmatpush.bf16.msra.mxu0 %v1005
  %1047 = vmatpush.bf16.msra.mxu0 %v1004
  %1048 = vmatpush.bf16.msra.mxu0 %v1003
  %1049 = vmatpush.bf16.msra.mxu0 %v1002
  %1050 = vmatmul.bf16.gmra.mxu0 %v1027
  %v1051 = vpop.f32.mrf.mxu0
  %v1052 = vadd.f32 0.0, %v1051
  %v1053 = vpop.f32.mrf.mxu0
  %v1054 = vadd.f32 0.0, %v1053
  %1055 = vmatmul.bf16.gmra.mxu0 %v1030
  %v1056 = vpop.f32.mrf.mxu0
  %v1057 = vadd.f32 0.0, %v1056
  %v1058 = vpop.f32.mrf.mxu0
  %v1059 = vadd.f32 0.0, %v1058
  %1060 = vmatmul.bf16.gmra.mxu0 %v1033
  %v1061 = vpop.f32.mrf.mxu0
  %v1062 = vadd.f32 0.0, %v1061
  %v1063 = vpop.f32.mrf.mxu0
  %v1064 = vadd.f32 0.0, %v1063
  %1065 = vdwg.mxu0
  %v1066 = vpack.c.bf16 %v1052, %v1052
  %v1067 = vpack.c.bf16 %v1054, %v1054
  %v1068 = vpack.c.bf16 %v1057, %v1057
  %v1069 = vpack.c.bf16 %v1059, %v1059
  %v1070 = vpack.c.bf16 %v1062, %v1062
  %v1071 = vpack.c.bf16 %v1064, %v1064
  %v1072 = vld [vmem:[%s4] sm:$0xf]
  %s1073 = scalar_lea.vmem %s4, 4
  %v1074 = vld [vmem:[%s1073] sm:$0xf]
  %v1081 = vunpack.c.l.b16 %v1066
  %v1082 = vunpack.c.l.b16 %v1067
  %v1083 = vunpack.c.l.b16 %v1068
  %v1084 = vunpack.c.l.b16 %v1069
  %v1085 = vunpack.c.l.b16 %v1070
  %v1086 = vunpack.c.l.b16 %v1071
  %v1087 = vpack.c.b16 %v1082, %v1081
  %v1088 = vpack.c.b16 %v1084, %v1083
  %v1089 = vpack.c.b16 %v1086, %v1085
  %v1091 = vshrl.u32 %v1087, 16
  %v1093 = vshll.u32 %v1087, 16
  %v1095 = vrot.slane %v1093, 1
  %v1096 = vor.u32 %v1091, %v1095
  %v1098 = vshll.u32 %v1088, 16
  %v1100 = vrot.slane %v1098, 1
  %v1101 = vsel %vm128, %v1096, %v1100
  %v1102 = vshrl.u32 %v1088, 16
  %v1104 = vor.u32 %v1102, %v1100
  %v1106 = vshll.u32 %v1089, 16
  %v1108 = vrot.slane %v1106, 1
  %v1109 = vsel %vm128, %v1104, %v1108
  %v1110 = vshrl.u32 %v1089, 16
  %v1112 = vor.u32 %v1110, %v1108
  %vm1113 = vcmask 64512
  %v1115 = vsel %vm1113, %v1101, 0
  %v1118 = vsel %vm1113, %v1109, 0
  %v1121 = vsel %vm1113, %v1112, 0
  %vm1123 = vcmask 1043456
  %v1125 = vsel %vm1123, %v1074, 0
  %1127 = vmatpush.bf16.msra.mxu0 0
  %1128 = vmatpush.bf16.msra.mxu0 0
  %1129 = vmatpush.bf16.msra.mxu0 0
  %1130 = vmatpush.bf16.msra.mxu0 0
  %1131 = vmatpush.bf16.msra.mxu0 0
  %1132 = vmatpush.bf16.msra.mxu0 0
  %1133 = vmatpush.bf16.msra.mxu0 0
  %1134 = vmatpush.bf16.msra.mxu0 %v1125
  %1135 = vmatmul.bf16.gmra.mxu0 %v1115
  %v1136 = vpop.f32.mrf.mxu0
  %v1137 = vadd.f32 0.0, %v1136
  %v1138 = vpop.f32.mrf.mxu0
  %v1139 = vadd.f32 0.0, %v1138
  %1140 = vmatmul.bf16.gmra.mxu0 %v1118
  %v1141 = vpop.f32.mrf.mxu0
  %v1142 = vadd.f32 0.0, %v1141
  %v1143 = vpop.f32.mrf.mxu0
  %v1144 = vadd.f32 0.0, %v1143
  %1145 = vmatmul.bf16.gmra.mxu0 %v1121
  %v1146 = vpop.f32.mrf.mxu0
  %v1147 = vadd.f32 0.0, %v1146
  %v1148 = vpop.f32.mrf.mxu0
  %v1149 = vadd.f32 0.0, %v1148
  %1150 = vdwg.mxu0
  %v1151 = vsel %vm1113, %v1087, 0
  %v1153 = vsel %vm1113, %v1088, 0
  %v1155 = vsel %vm1113, %v1089, 0
  %v1158 = vsel %vm1123, %v1072, 0
  %1160 = vmatpush.bf16.msra.mxu0 0
  %1161 = vmatpush.bf16.msra.mxu0 0
  %1162 = vmatpush.bf16.msra.mxu0 0
  %1163 = vmatpush.bf16.msra.mxu0 0
  %1164 = vmatpush.bf16.msra.mxu0 0
  %1165 = vmatpush.bf16.msra.mxu0 0
  %1166 = vmatpush.bf16.msra.mxu0 0
  %1167 = vmatpush.bf16.msra.mxu0 %v1158
  %1168 = vmatmul.bf16.gmra.mxu0 %v1151
  %v1169 = vpop.f32.mrf.mxu0
  %v1170 = vadd.f32 %v1137, %v1169
  %v1171 = vpop.f32.mrf.mxu0
  %v1172 = vadd.f32 %v1139, %v1171
  %1173 = vmatmul.bf16.gmra.mxu0 %v1153
  %v1174 = vpop.f32.mrf.mxu0
  %v1175 = vadd.f32 %v1142, %v1174
  %v1176 = vpop.f32.mrf.mxu0
  %v1177 = vadd.f32 %v1144, %v1176
  %1178 = vmatmul.bf16.gmra.mxu0 %v1155
  %v1179 = vpop.f32.mrf.mxu0
  %v1180 = vadd.f32 %v1147, %v1179
  %v1181 = vpop.f32.mrf.mxu0
  %v1182 = vadd.f32 %v1149, %v1181
  %1183 = vdwg.mxu0
  %s1184 = scalar_lea.vmem %s4, 8
  %v1185 = vld [vmem:[%s1184] sm:$0xf]
  %v1186 = vrot.slane %v1087, 1
  %v1187 = vrot.slane %v1088, 1
  %v1188 = vsel %vm419, %v1186, %v1187
  %v1189 = vrot.slane %v1089, 1
  %v1190 = vsel %vm419, %v1187, %v1189
  %v1192 = vsel %vm1113, %v1188, 0
  %v1195 = vsel %vm1113, %v1190, 0
  %v1198 = vsel %vm1113, %v1189, 0
  %v1201 = vsel %vm1123, %v1185, 0
  %1203 = vmatpush.bf16.msra.mxu0 0
  %1204 = vmatpush.bf16.msra.mxu0 0
  %1205 = vmatpush.bf16.msra.mxu0 0
  %1206 = vmatpush.bf16.msra.mxu0 0
  %1207 = vmatpush.bf16.msra.mxu0 0
  %1208 = vmatpush.bf16.msra.mxu0 0
  %1209 = vmatpush.bf16.msra.mxu0 0
  %1210 = vmatpush.bf16.msra.mxu0 %v1201
  %1211 = vmatmul.bf16.gmra.mxu0 %v1192
  %v1212 = vpop.f32.mrf.mxu0
  %v1213 = vadd.f32 0.0, %v1212
  %v1214 = vpop.f32.mrf.mxu0
  %v1215 = vadd.f32 0.0, %v1214
  %1216 = vmatmul.bf16.gmra.mxu0 %v1195
  %v1217 = vpop.f32.mrf.mxu0
  %v1218 = vadd.f32 0.0, %v1217
  %v1219 = vpop.f32.mrf.mxu0
  %v1220 = vadd.f32 0.0, %v1219
  %1221 = vmatmul.bf16.gmra.mxu0 %v1198
  %v1222 = vpop.f32.mrf.mxu0
  %v1223 = vadd.f32 0.0, %v1222
  %v1224 = vpop.f32.mrf.mxu0
  %v1225 = vadd.f32 0.0, %v1224
  %1226 = vdwg.mxu0
  %v1227 = vadd.f32 %v1170, %v1213
  %v1228 = vadd.f32 %v1172, %v1215
  %v1229 = vadd.f32 %v1175, %v1218
  %v1230 = vadd.f32 %v1177, %v1220
  %v1231 = vadd.f32 %v1180, %v1223
  %v1232 = vadd.f32 %v1182, %v1225
  %s1233 = scalar_lea.vmem %s4, 12
  %v1234 = vld [vmem:[%s1233] sm:$0xf]
  %v1235 = vrot.slane %v1091, 1
  %v1236 = vrot.slane %v1093, 2
  %v1237 = vor.u32 %v1235, %v1236
  %v1238 = vrot.slane %v1102, 1
  %v1239 = vrot.slane %v1098, 2
  %v1240 = vor.u32 %v1238, %v1239
  %v1241 = vsel %vm573, %v1237, %v1240
  %v1242 = vrot.slane %v1110, 1
  %v1243 = vrot.slane %v1106, 2
  %v1244 = vor.u32 %v1242, %v1243
  %v1245 = vsel %vm573, %v1240, %v1244
  %v1247 = vsel %vm1113, %v1241, 0
  %v1250 = vsel %vm1113, %v1245, 0
  %v1253 = vsel %vm1113, %v1244, 0
  %v1256 = vsel %vm1123, %v1234, 0
  %1258 = vmatpush.bf16.msra.mxu0 0
  %1259 = vmatpush.bf16.msra.mxu0 0
  %1260 = vmatpush.bf16.msra.mxu0 0
  %1261 = vmatpush.bf16.msra.mxu0 0
  %1262 = vmatpush.bf16.msra.mxu0 0
  %1263 = vmatpush.bf16.msra.mxu0 0
  %1264 = vmatpush.bf16.msra.mxu0 0
  %1265 = vmatpush.bf16.msra.mxu0 %v1256
  %1266 = vmatmul.bf16.gmra.mxu0 %v1247
  %v1267 = vpop.f32.mrf.mxu0
  %v1268 = vadd.f32 0.0, %v1267
  %v1269 = vpop.f32.mrf.mxu0
  %v1270 = vadd.f32 0.0, %v1269
  %1271 = vmatmul.bf16.gmra.mxu0 %v1250
  %v1272 = vpop.f32.mrf.mxu0
  %v1273 = vadd.f32 0.0, %v1272
  %v1274 = vpop.f32.mrf.mxu0
  %v1275 = vadd.f32 0.0, %v1274
  %1276 = vmatmul.bf16.gmra.mxu0 %v1253
  %v1277 = vpop.f32.mrf.mxu0
  %v1278 = vadd.f32 0.0, %v1277
  %v1279 = vpop.f32.mrf.mxu0
  %v1280 = vadd.f32 0.0, %v1279
  %1281 = vdwg.mxu0
  %v1282 = vadd.f32 %v1227, %v1268
  %v1283 = vadd.f32 %v1228, %v1270
  %v1284 = vadd.f32 %v1229, %v1273
  %v1285 = vadd.f32 %v1230, %v1275
  %v1286 = vadd.f32 %v1231, %v1278
  %v1287 = vadd.f32 %v1232, %v1280
  %s1288 = scalar_lea.vmem %s4, 16
  %v1289 = vld [vmem:[%s1288] sm:$0xf]
  %v1290 = vrot.slane %v1087, 2
  %v1291 = vrot.slane %v1088, 2
  %v1292 = vsel %vm743, %v1290, %v1291
  %v1293 = vrot.slane %v1089, 2
  %v1294 = vsel %vm743, %v1291, %v1293
  %v1296 = vsel %vm1113, %v1292, 0
  %v1299 = vsel %vm1113, %v1294, 0
  %v1302 = vsel %vm1113, %v1293, 0
  %v1305 = vsel %vm1123, %v1289, 0
  %1307 = vmatpush.bf16.msra.mxu0 0
  %1308 = vmatpush.bf16.msra.mxu0 0
  %1309 = vmatpush.bf16.msra.mxu0 0
  %1310 = vmatpush.bf16.msra.mxu0 0
  %1311 = vmatpush.bf16.msra.mxu0 0
  %1312 = vmatpush.bf16.msra.mxu0 0
  %1313 = vmatpush.bf16.msra.mxu0 0
  %1314 = vmatpush.bf16.msra.mxu0 %v1305
  %1315 = vmatmul.bf16.gmra.mxu0 %v1296
  %v1316 = vpop.f32.mrf.mxu0
  %v1317 = vadd.f32 0.0, %v1316
  %v1318 = vpop.f32.mrf.mxu0
  %v1319 = vadd.f32 0.0, %v1318
  %1320 = vmatmul.bf16.gmra.mxu0 %v1299
  %v1321 = vpop.f32.mrf.mxu0
  %v1322 = vadd.f32 0.0, %v1321
  %v1323 = vpop.f32.mrf.mxu0
  %v1324 = vadd.f32 0.0, %v1323
  %1325 = vmatmul.bf16.gmra.mxu0 %v1302
  %v1326 = vpop.f32.mrf.mxu0
  %v1327 = vadd.f32 0.0, %v1326
  %v1328 = vpop.f32.mrf.mxu0
  %v1329 = vadd.f32 0.0, %v1328
  %1330 = vdwg.mxu0
  %v1331 = vadd.f32 %v1282, %v1317
  %v1332 = vadd.f32 %v1283, %v1319
  %v1333 = vadd.f32 %v1284, %v1322
  %v1334 = vadd.f32 %v1285, %v1324
  %v1335 = vadd.f32 %v1286, %v1327
  %v1336 = vadd.f32 %v1287, %v1329
  %v1337 = vld [vmem:[%s5] sm:$0x1]
  %v1339 = vperm.slane %v1337, 0
  %v1341 = vadd.f32 %v1331, %v1339
  %v1342 = vadd.f32 %v1332, %v1339
  %v1343 = vadd.f32 %v1333, %v1339
  %v1344 = vadd.f32 %v1334, %v1339
  %v1345 = vadd.f32 %v1335, %v1339
  %v1346 = vadd.f32 %v1336, %v1339
  %v1347 = vmax.f32 %v1341, 0.0
  %v1348 = vmax.f32 %v1342, 0.0
  %v1349 = vmax.f32 %v1343, 0.0
  %v1350 = vmax.f32 %v1344, 0.0
  %v1351 = vmax.f32 %v1345, 0.0
  %v1352 = vmax.f32 %v1346, 0.0
  %v1353 = vpack.c.bf16 %v1348, %v1347
  %v1354 = vpack.c.bf16 %v1350, %v1349
  %v1355 = vpack.c.bf16 %v1352, %v1351
  %v1356 = vld [vmem:[%s6] sm:$0xf]
  %vm1357 = vcmask 359424
  %v1359 = vsel %vm1357, %v1356, 0
  %v1362 = vsel %vm1036, %v1355, 0
  %1364 = vmatpush.bf16.msra.mxu0 0
  %1365 = vmatpush.bf16.msra.mxu0 0
  %1366 = vmatpush.bf16.msra.mxu0 0
  %1367 = vmatpush.bf16.msra.mxu0 0
  %1368 = vmatpush.bf16.msra.mxu0 0
  %1369 = vmatpush.bf16.msra.mxu0 %v1362
  %1370 = vmatpush.bf16.msra.mxu0 %v1354
  %1371 = vmatpush.bf16.msra.mxu0 %v1353
  %1372 = vmatmul.bf16.gmra.mxu0 %v1359
  %v1373 = vpop.f32.mrf.mxu0
  %v1374 = vadd.f32 0.0, %v1373
  %v1375 = vpop.f32.mrf.mxu0
  %1376 = vdwg.mxu0
  %v1377 = vpack.c.bf16 %v1374, %v1374
  %v1378 = vld [vmem:[%s7] sm:$0xf]
  %v1379 = vld [vmem:[%s7 + $0x4] sm:$0xf]
  %v1380 = vld [vmem:[%s6 + $0x4] sm:$0xf]
  %v1382 = vsel %vm1357, %v1380, 0
  %1384 = vmatpush.bf16.msra.mxu0 0
  %1385 = vmatpush.bf16.msra.mxu0 0
  %1386 = vmatpush.bf16.msra.mxu0 0
  %1387 = vmatpush.bf16.msra.mxu0 0
  %1388 = vmatpush.bf16.msra.mxu0 0
  %1389 = vmatpush.bf16.msra.mxu0 %v1362
  %1390 = vmatpush.bf16.msra.mxu0 %v1354
  %1391 = vmatpush.bf16.msra.mxu0 %v1353
  %1392 = vmatmul.bf16.gmra.mxu0 %v1382
  %v1393 = vpop.f32.mrf.mxu0
  %v1394 = vadd.f32 0.0, %v1393
  %v1395 = vpop.f32.mrf.mxu0
  %1396 = vdwg.mxu0
  %v1397 = vpack.c.bf16 %v1394, %v1394
  %v1398 = vld [vmem:[%s7 + $0x8] sm:$0xf]
  %v1399 = vld [vmem:[%s7 + $0xc] sm:$0xf]
  %v1402 = vunpack.c.l.b16 %v1398
  %v1403 = vunpack.c.l.b16 %v1399
  %v1404 = vpack.c.b16 %v1403, %v1402
  %vm1406 = vcmask 130048
  %v1408 = vsel %vm1406, %v1397, 0
  %1410 = vmatpush.bf16.msra.mxu0 0
  %1411 = vmatpush.bf16.msra.mxu0 0
  %1412 = vmatpush.bf16.msra.mxu0 0
  %1413 = vmatpush.bf16.msra.mxu0 0
  %1414 = vmatpush.bf16.msra.mxu0 0
  %1415 = vmatpush.bf16.msra.mxu0 0
  %1416 = vmatpush.bf16.msra.mxu0 0
  %1417 = vmatpush.bf16.msra.mxu0 %v1404
  %1418 = vmatmul.bf16.gmra.mxu0 %v1408
  %v1419 = vpop.f32.mrf.mxu0
  %v1420 = vadd.f32 0.0, %v1419
  %v1421 = vpop.f32.mrf.mxu0
  %1422 = vdwg.mxu0
  %v1425 = vunpack.c.l.b16 %v1378
  %v1426 = vunpack.c.l.b16 %v1379
  %v1427 = vpack.c.b16 %v1426, %v1425
  %v1430 = vsel %vm1406, %v1377, 0
  %1432 = vmatpush.bf16.msra.mxu0 0
  %1433 = vmatpush.bf16.msra.mxu0 0
  %1434 = vmatpush.bf16.msra.mxu0 0
  %1435 = vmatpush.bf16.msra.mxu0 0
  %1436 = vmatpush.bf16.msra.mxu0 0
  %1437 = vmatpush.bf16.msra.mxu0 0
  %1438 = vmatpush.bf16.msra.mxu0 0
  %1439 = vmatpush.bf16.msra.mxu0 %v1427
  %1440 = vmatmul.bf16.gmra.mxu0 %v1430
  %v1441 = vpop.f32.mrf.mxu0
  %v1442 = vadd.f32 %v1420, %v1441
  %v1443 = vpop.f32.mrf.mxu0
  %1444 = vdwg.mxu0
  %v1445 = vld [vmem:[%s8] sm:$0x1]
  %v1447 = vperm.slane %v1445, 0
  %v1449 = vadd.f32 %v1442, %v1447
  %v1450 = vmax.f32 %v1449, 0.0
  %v1451 = vpack.c.bf16 %v1450, %v1450
  %v1452 = vld [vmem:[%s9] sm:$0xf]
  %v1453 = vld [vmem:[%s9 + $0x4] sm:$0xf]
  %v1454 = vld [vmem:[%s9 + $0x8] sm:$0xf]
  %v1455 = vld [vmem:[%s9 + $0xc] sm:$0xf]
  %v1456 = vld [vmem:[%s10] sm:$0x1]
  %v1458 = vperm.slane %v1456, 0
  %v1464 = vunpack.c.l.b16 %v1452
  %v1465 = vunpack.c.l.b16 %v1453
  %v1466 = vunpack.c.l.b16 %v1454
  %v1467 = vunpack.c.l.b16 %v1455
  %v1468 = vpack.c.b16 %v1465, %v1464
  %v1469 = vpack.c.b16 %v1467, %v1466
  %vm1472 = vcmask 261120
  %v1474 = vsel %vm1472, %v1451, 0
  %1476 = vmatpush.bf16.msra.mxu0 0
  %1477 = vmatpush.bf16.msra.mxu0 0
  %1478 = vmatpush.bf16.msra.mxu0 0
  %1479 = vmatpush.bf16.msra.mxu0 0
  %1480 = vmatpush.bf16.msra.mxu0 0
  %1481 = vmatpush.bf16.msra.mxu0 0
  %1482 = vmatpush.bf16.msra.mxu0 %v1469
  %1483 = vmatpush.bf16.msra.mxu0 %v1468
  %1484 = vmatmul.bf16.gmra.mxu0 %v1474
  %v1485 = vpop.f32.mrf.mxu0
  %v1486 = vadd.f32 %v1458, %v1485
  %v1487 = vpop.f32.mrf.mxu0
  %1488 = vdwg.mxu0
  %1489 = vst [vmem:[%s11] sm:$0xff] %v1486
  // Predicated region
  $region46: #{dgcnn_forward.3} parent=0 // pred_check
    _
  $region47: #{dgcnn_forward.3} parent=0 // pred_check_branch
    %1491 = sbr.rel (0) target = $region49
  $region48: #{dgcnn_forward.3} parent=0 // pred_region
    _
  $region49: #{dgcnn_forward.3} parent=0 // pred_fallthru
    _
  // Predicated region
  $region50: #{dgcnn_forward.3} parent=0 // pred_check
    _
  $region51: #{dgcnn_forward.3} parent=0 // pred_check_branch
    %1493 = sbr.rel (0) target = $region53
  $region52: #{dgcnn_forward.3} parent=0 // pred_region
    _
  $region53: #{dgcnn_forward.3} parent=0 // pred_fallthru
    _

</llo_original>
